<compile_context>
chip_gen: v7x
topology: tpu7x:2x2x1
jax: 0.10.0
libtpu: 0.0.40
codegen_flags: <defaults>
</compile_context>

<pallas_src>
import numpy as np
import jax
import jax.numpy as jnp
from jax import lax
from jax.experimental import pallas as pl
from jax.experimental.pallas import tpu as pltpu

# ---------------- small, module-consistent shapes ----------------
B  = 2      # batch
L  = 16     # 1-D signal length fed to the Conv1d's
C0 = 16     # c_out[0] : Conv1d channels
C1 = 16     # c_out[1] : Conv2d channels
C2 = 32     # c_out[2] : hidden width of full1
NC = 10     # n_classes
K1 = 5      # kernel_size[0] (Conv1d, "valid")
K2 = 4      # kernel_size[1] (Conv2d, "valid")
LW = L - K1 + 1          # Conv1d output length
S  = C0 - K2 + 1         # Conv2d output spatial size ("out2size")
NP = 128    # padded (lane-dense) logit width; real logits are [:, :NC]


# ---------------- the kernel (one grid step for the whole batch) ----------------
def emlp_kernel(x_ref, ww_ref, bw_ref, wh_ref, bh_ref, rt_ref, g_ref, bf_ref,
                out_ref):
    xall = x_ref[...]            # (B, 2, L)
    ww = ww_ref[...]             # (C0, K1)
    bw = bw_ref[...]             # (C0, 1)
    wh = wh_ref[...]             # (C0, K1)
    bh = bh_ref[...]             # (C0, 1)
    rt = rt_ref[...]             # (K2, C0)  window-sum selector (0/1)
    bf = bf_ref[...]             # (1, NP)   fused bias (conv2/full1/full2)

    rows = []
    for b in range(B):           # B == 2, static unroll
        xw = xall[b, 0:1, :]     # (1, L)
        xh = xall[b, 1:2, :]     # (1, L)

        # Conv1d(1, C0, K1), valid, as an MXU matmul against a (K1, LW)
        # patch matrix built from K1 static lane-shifts.
        pw = jnp.concatenate([xw[:, k:k + LW] for k in range(K1)], axis=0)
        ph = jnp.concatenate([xh[:, k:k + LW] for k in range(K1)], axis=0)
        ow = jnp.maximum(jnp.dot(ww, pw, preferred_element_type=jnp.float32) + bw, 0.0)
        oh = jnp.maximum(jnp.dot(wh, ph, preferred_element_type=jnp.float32) + bh, 0.0)

        # Window sums of out_mat = ow @ oh^T, done separably on the MXU:
        #   A = R^T (ow @ oh^T) R = (R^T ow) @ (R^T oh)^T      (K2, K2)
        sw = jnp.dot(rt, ow, preferred_element_type=jnp.float32)   # (K2, LW)
        sh = jnp.dot(rt, oh, preferred_element_type=jnp.float32)   # (K2, LW)
        a = lax.dot_general(sw, sh, (((1,), (1,)), ((), ())),
                            preferred_element_type=jnp.float32)    # (K2, K2)

        # Fused conv2-sum + full1 + full2 (+ the 1/LW mean factor), all
        # pre-folded into g_ref (K2*K2, NP) and bf (1, NP).
        acc = bf
        for u in range(K2):
            acc = acc + jnp.dot(a[u:u + 1, :], g_ref[u * K2:(u + 1) * K2, :],
                                preferred_element_type=jnp.float32)  # (1, NP)
        rows.append(acc)

    out_ref[...] = jnp.concatenate(rows, axis=0)   # single lane-dense (B, NP) store


# ---------------- wrapper ----------------
def emlp_forward(x, raw_params):
    ww, bw, wh, bh, w2, b2, w1, b1, wlast, blast = raw_params
    hp = lax.Precision.HIGHEST

    # glue: squeeze the singleton "channel" dim, pre-arrange parameters.
    x2  = x[:, :, 0, :]                                   # (B, 2, L)
    bwc = bw.reshape(C0, 1)
    bhc = bh.reshape(C0, 1)

    # 0/1 selector: row u sums out_mat rows/cols u .. u+S-1  (K2, C0)
    rt_np = np.zeros((K2, C0), np.float32)
    for u in range(K2):
        rt_np[u, u:u + S] = 1.0
    rt = jnp.asarray(rt_np)

    # Fold conv2-sum + full1 + full2 (and the 1/LW mean) into one weight/bias:
    #   logits = sum_{u,v} A[u,v] * G[u*K2+v, :] + b_fused
    w12   = jnp.dot(w1.T, wlast.T, precision=hp)                   # (C1, NC)
    g0    = jnp.einsum('cuv,cn->uvn', w2, w12, precision=hp)       # (K2, K2, NC)
    gflat = g0.reshape(K2 * K2, NC) / float(LW)
    gpad  = jnp.zeros((K2 * K2, NP), jnp.float32).at[:, :NC].set(gflat)

    bfull = (float(S * S) * jnp.dot(b2, w12, precision=hp)
             + jnp.dot(b1, wlast.T, precision=hp) + blast)         # (NC,)
    bfpad = jnp.zeros((1, NP), jnp.float32).at[0, :NC].set(bfull)

    def full(shape):
        return pl.BlockSpec(shape, lambda i: (0,) * len(shape))

    out = pl.pallas_call(
        emlp_kernel,
        out_shape=jax.ShapeDtypeStruct((B, NP), jnp.float32),
        grid=(1,),
        in_specs=[
            full((B, 2, L)),                  # x (whole batch)
            full((C0, K1)), full((C0, 1)),    # convw
            full((C0, K1)), full((C0, 1)),    # convh
            full((K2, C0)),                   # window-sum selector
            full((K2 * K2, NP)),              # fused conv2/full1/full2 weight
            full((1, NP)),                    # fused bias
        ],
        out_specs=full((B, NP)),
        compiler_params=pltpu.CompilerParams(
            dimension_semantics=("arbitrary",)),
    )(x2, ww, bwc, wh, bhc, rt, gpad, bfpad)
    return out[:, :NC]


# ---------------- deterministic params & pure-JAX reference ----------------
def init_params(key):
    ks = jax.random.split(key, 10)
    s = 0.1
    ww    = jax.random.normal(ks[0], (C0, K1), jnp.float32) * s   # convw.weight (C0,1,K1) squeezed
    bw    = jax.random.normal(ks[1], (C0,),    jnp.float32) * s
    wh    = jax.random.normal(ks[2], (C0, K1), jnp.float32) * s   # convh.weight squeezed
    bh    = jax.random.normal(ks[3], (C0,),    jnp.float32) * s
    w2    = jax.random.normal(ks[4], (C1, K2, K2), jnp.float32) * s  # conv2.weight (C1,1,K2,K2) squeezed
    b2    = jax.random.normal(ks[5], (C1,),    jnp.float32) * s
    w1    = jax.random.normal(ks[6], (C2, C1), jnp.float32) * s   # full1.weight (out,in)
    b1    = jax.random.normal(ks[7], (C2,),    jnp.float32) * s
    wlast = jax.random.normal(ks[8], (NC, C2), jnp.float32) * s   # full2.weight (out,in)
    blast = jax.random.normal(ks[9], (NC,),    jnp.float32) * s
    return ww, bw, wh, bh, w2, b2, w1, b1, wlast, blast


def ref_forward(x, raw_params):
    """Plain-JAX reference mirroring the torch forward op-by-op."""
    ww, bw, wh, bh, w2, b2, w1, b1, wlast, blast = raw_params
    xw = x[:, 0, 0, :]   # (B, L)
    xh = x[:, 1, 0, :]
    pw = jnp.stack([xw[:, k:k + LW] for k in range(K1)], axis=-1)  # (B, LW, K1)
    ph = jnp.stack([xh[:, k:k + LW] for k in range(K1)], axis=-1)
    hp = lax.Precision.HIGHEST
    ow = jax.nn.relu(jnp.einsum('blk,ck->bcl', pw, ww, precision=hp) + bw[None, :, None])
    oh = jax.nn.relu(jnp.einsum('blk,ck->bcl', ph, wh, precision=hp) + bh[None, :, None])
    out = (ow[:, :, None, :] * oh[:, None, :, :]).mean(-1)          # (B, C0, C0)
    patches = jnp.stack(
        [jnp.stack([out[:, p:p + K2, q:q + K2] for q in range(S)], axis=1)
         for p in range(S)], axis=1)                                 # (B, S, S, K2, K2)
    y = jnp.einsum('bpquv,cuv->bcpq', patches, w2, precision=hp) + b2[None, :, None, None]
    out2 = y.sum(-1).sum(-1)                                         # (B, C1)
    h = jnp.dot(out2, w1.T, precision=hp) + b1[None, :]
    return jnp.dot(h, wlast.T, precision=hp) + blast[None, :]


if __name__ == "__main__":
    key = jax.random.PRNGKey(0)
    kx, kp = jax.random.split(key)
    x = jax.random.normal(kx, (B, 2, 1, L), jnp.float32)   # torch-style input layout
    params = init_params(kp)

    out = emlp_forward(x, params)
    out = jax.block_until_ready(out)

    ref = jax.block_until_ready(ref_forward(x, params))
    np.testing.assert_allclose(np.asarray(out), np.asarray(ref), rtol=1e-3, atol=1e-3)
    assert out.shape == (B, NC)
    print("KERNEL_OK")
</pallas_src>

<mosaic_0001>
module attributes {stable_mosaic.version = 11 : i64} {
  func.func @emlp_kernel(%arg0: i32, %arg1: memref<2x2x16xf32, #tpu.memory_space<vmem>>, %arg2: memref<16x5xf32, #tpu.memory_space<vmem>>, %arg3: memref<16x1xf32, #tpu.memory_space<vmem>>, %arg4: memref<16x5xf32, #tpu.memory_space<vmem>>, %arg5: memref<16x1xf32, #tpu.memory_space<vmem>>, %arg6: memref<4x16xf32, #tpu.memory_space<vmem>>, %arg7: memref<16x128xf32, #tpu.memory_space<vmem>>, %arg8: memref<1x128xf32, #tpu.memory_space<vmem>>, %arg9: memref<2x128xf32, #tpu.memory_space<vmem>>) attributes {dimension_semantics = [#tpu.dimension_semantics<arbitrary>], iteration_bounds = array<i64: 1>, scalar_prefetch = 0 : i64, scratch_operands = 0 : i64, tpu.core_type = #tpu.core_type<tc>, window_params = [{pipeline_mode = #tpu.pipeline_mode<synchronous>, transform_indices = @transform_0, window_bounds = array<i64: 2, 2, 16>}, {pipeline_mode = #tpu.pipeline_mode<synchronous>, transform_indices = @transform_1, window_bounds = array<i64: 16, 5>}, {pipeline_mode = #tpu.pipeline_mode<synchronous>, transform_indices = @transform_2, window_bounds = array<i64: 16, 1>}, {pipeline_mode = #tpu.pipeline_mode<synchronous>, transform_indices = @transform_3, window_bounds = array<i64: 16, 5>}, {pipeline_mode = #tpu.pipeline_mode<synchronous>, transform_indices = @transform_4, window_bounds = array<i64: 16, 1>}, {pipeline_mode = #tpu.pipeline_mode<synchronous>, transform_indices = @transform_5, window_bounds = array<i64: 4, 16>}, {pipeline_mode = #tpu.pipeline_mode<synchronous>, transform_indices = @transform_6, window_bounds = array<i64: 16, 128>}, {pipeline_mode = #tpu.pipeline_mode<synchronous>, transform_indices = @transform_7, window_bounds = array<i64: 1, 128>}, {pipeline_mode = #tpu.pipeline_mode<synchronous>, transform_indices = @transform_8, window_bounds = array<i64: 2, 128>}]} {
    %c0 = arith.constant 0 : index
    %c0_0 = arith.constant 0 : index
    %c0_1 = arith.constant 0 : index
    %0 = vector.load %arg1[%c0, %c0_0, %c0_1] : memref<2x2x16xf32, #tpu.memory_space<vmem>>, vector<2x2x16xf32>
    %c0_2 = arith.constant 0 : index
    %c0_3 = arith.constant 0 : index
    %1 = vector.load %arg2[%c0_2, %c0_3] : memref<16x5xf32, #tpu.memory_space<vmem>>, vector<16x5xf32>
    %c0_4 = arith.constant 0 : index
    %c0_5 = arith.constant 0 : index
    %2 = vector.load %arg3[%c0_4, %c0_5] : memref<16x1xf32, #tpu.memory_space<vmem>>, vector<16x1xf32>
    %c0_6 = arith.constant 0 : index
    %c0_7 = arith.constant 0 : index
    %3 = vector.load %arg4[%c0_6, %c0_7] : memref<16x5xf32, #tpu.memory_space<vmem>>, vector<16x5xf32>
    %c0_8 = arith.constant 0 : index
    %c0_9 = arith.constant 0 : index
    %4 = vector.load %arg5[%c0_8, %c0_9] : memref<16x1xf32, #tpu.memory_space<vmem>>, vector<16x1xf32>
    %c0_10 = arith.constant 0 : index
    %c0_11 = arith.constant 0 : index
    %5 = vector.load %arg6[%c0_10, %c0_11] : memref<4x16xf32, #tpu.memory_space<vmem>>, vector<4x16xf32>
    %c0_12 = arith.constant 0 : index
    %c0_13 = arith.constant 0 : index
    %6 = vector.load %arg8[%c0_12, %c0_13] : memref<1x128xf32, #tpu.memory_space<vmem>>, vector<1x128xf32>
    %7 = vector.extract_strided_slice %0 {offsets = [0, 0, 0], sizes = [1, 1, 16], strides = [1, 1, 1]} : vector<2x2x16xf32> to vector<1x1x16xf32>
    %8 = vector.shape_cast %7 : vector<1x1x16xf32> to vector<1x16xf32>
    %9 = vector.extract_strided_slice %0 {offsets = [0, 1, 0], sizes = [1, 1, 16], strides = [1, 1, 1]} : vector<2x2x16xf32> to vector<1x1x16xf32>
    %10 = vector.shape_cast %9 : vector<1x1x16xf32> to vector<1x16xf32>
    %11 = vector.extract_strided_slice %8 {offsets = [0, 0], sizes = [1, 12], strides = [1, 1]} : vector<1x16xf32> to vector<1x12xf32>
    %12 = vector.extract_strided_slice %8 {offsets = [0, 1], sizes = [1, 12], strides = [1, 1]} : vector<1x16xf32> to vector<1x12xf32>
    %13 = vector.extract_strided_slice %8 {offsets = [0, 2], sizes = [1, 12], strides = [1, 1]} : vector<1x16xf32> to vector<1x12xf32>
    %14 = vector.extract_strided_slice %8 {offsets = [0, 3], sizes = [1, 12], strides = [1, 1]} : vector<1x16xf32> to vector<1x12xf32>
    %15 = vector.extract_strided_slice %8 {offsets = [0, 4], sizes = [1, 12], strides = [1, 1]} : vector<1x16xf32> to vector<1x12xf32>
    %16 = tpu.concatenate %11, %12, %13, %14, %15 in 0 : vector<1x12xf32>, vector<1x12xf32>, vector<1x12xf32>, vector<1x12xf32>, vector<1x12xf32> -> vector<5x12xf32>
    %17 = vector.extract_strided_slice %10 {offsets = [0, 0], sizes = [1, 12], strides = [1, 1]} : vector<1x16xf32> to vector<1x12xf32>
    %18 = vector.extract_strided_slice %10 {offsets = [0, 1], sizes = [1, 12], strides = [1, 1]} : vector<1x16xf32> to vector<1x12xf32>
    %19 = vector.extract_strided_slice %10 {offsets = [0, 2], sizes = [1, 12], strides = [1, 1]} : vector<1x16xf32> to vector<1x12xf32>
    %20 = vector.extract_strided_slice %10 {offsets = [0, 3], sizes = [1, 12], strides = [1, 1]} : vector<1x16xf32> to vector<1x12xf32>
    %21 = vector.extract_strided_slice %10 {offsets = [0, 4], sizes = [1, 12], strides = [1, 1]} : vector<1x16xf32> to vector<1x12xf32>
    %22 = tpu.concatenate %17, %18, %19, %20, %21 in 0 : vector<1x12xf32>, vector<1x12xf32>, vector<1x12xf32>, vector<1x12xf32>, vector<1x12xf32> -> vector<5x12xf32>
    %cst = arith.constant dense<0.000000e+00> : vector<16x12xf32>
    %23 = tpu.matmul %1, %16, %cst {dimension_numbers = #tpu.dot_dimension_numbers<[1], [0], [0], [1], [0, 0, 1, 1], [], []>} : vector<16x5xf32>, vector<5x12xf32>, vector<16x12xf32> -> vector<16x12xf32>
    %24 = vector.broadcast %2 : vector<16x1xf32> to vector<16x12xf32>
    %25 = arith.addf %23, %24 : vector<16x12xf32>
    %cst_14 = arith.constant 0.000000e+00 : f32
    %26 = vector.broadcast %cst_14 : f32 to vector<16x12xf32>
    %27 = arith.maximumf %25, %26 : vector<16x12xf32>
    %cst_15 = arith.constant dense<0.000000e+00> : vector<16x12xf32>
    %28 = tpu.matmul %3, %22, %cst_15 {dimension_numbers = #tpu.dot_dimension_numbers<[1], [0], [0], [1], [0, 0, 1, 1], [], []>} : vector<16x5xf32>, vector<5x12xf32>, vector<16x12xf32> -> vector<16x12xf32>
    %29 = vector.broadcast %4 : vector<16x1xf32> to vector<16x12xf32>
    %30 = arith.addf %28, %29 : vector<16x12xf32>
    %cst_16 = arith.constant 0.000000e+00 : f32
    %31 = vector.broadcast %cst_16 : f32 to vector<16x12xf32>
    %32 = arith.maximumf %30, %31 : vector<16x12xf32>
    %cst_17 = arith.constant dense<0.000000e+00> : vector<4x12xf32>
    %33 = tpu.matmul %5, %27, %cst_17 {dimension_numbers = #tpu.dot_dimension_numbers<[1], [0], [0], [1], [0, 0, 1, 1], [], []>} : vector<4x16xf32>, vector<16x12xf32>, vector<4x12xf32> -> vector<4x12xf32>
    %cst_18 = arith.constant dense<0.000000e+00> : vector<4x12xf32>
    %34 = tpu.matmul %5, %32, %cst_18 {dimension_numbers = #tpu.dot_dimension_numbers<[1], [0], [0], [1], [0, 0, 1, 1], [], []>} : vector<4x16xf32>, vector<16x12xf32>, vector<4x12xf32> -> vector<4x12xf32>
    %cst_19 = arith.constant dense<0.000000e+00> : vector<4x4xf32>
    %35 = tpu.matmul %33, %34, %cst_19 {dimension_numbers = #tpu.dot_dimension_numbers<[1], [1], [0], [0], [0, 0, 1, 0], [], []>} : vector<4x12xf32>, vector<4x12xf32>, vector<4x4xf32> -> vector<4x4xf32>
    %36 = vector.extract_strided_slice %35 {offsets = [0, 0], sizes = [1, 4], strides = [1, 1]} : vector<4x4xf32> to vector<1x4xf32>
    %c0_20 = arith.constant 0 : index
    %c0_21 = arith.constant 0 : index
    %37 = vector.load %arg7[%c0_20, %c0_21] : memref<16x128xf32, #tpu.memory_space<vmem>>, vector<4x128xf32>
    %cst_22 = arith.constant dense<0.000000e+00> : vector<1x128xf32>
    %38 = tpu.matmul %36, %37, %cst_22 {dimension_numbers = #tpu.dot_dimension_numbers<[1], [0], [0], [1], [0, 0, 1, 1], [], []>} : vector<1x4xf32>, vector<4x128xf32>, vector<1x128xf32> -> vector<1x128xf32>
    %39 = arith.addf %6, %38 : vector<1x128xf32>
    %40 = vector.extract_strided_slice %35 {offsets = [1, 0], sizes = [1, 4], strides = [1, 1]} : vector<4x4xf32> to vector<1x4xf32>
    %c4 = arith.constant 4 : index
    %c0_23 = arith.constant 0 : index
    %41 = vector.load %arg7[%c4, %c0_23] : memref<16x128xf32, #tpu.memory_space<vmem>>, vector<4x128xf32>
    %cst_24 = arith.constant dense<0.000000e+00> : vector<1x128xf32>
    %42 = tpu.matmul %40, %41, %cst_24 {dimension_numbers = #tpu.dot_dimension_numbers<[1], [0], [0], [1], [0, 0, 1, 1], [], []>} : vector<1x4xf32>, vector<4x128xf32>, vector<1x128xf32> -> vector<1x128xf32>
    %43 = arith.addf %39, %42 : vector<1x128xf32>
    %44 = vector.extract_strided_slice %35 {offsets = [2, 0], sizes = [1, 4], strides = [1, 1]} : vector<4x4xf32> to vector<1x4xf32>
    %c8 = arith.constant 8 : index
    %c0_25 = arith.constant 0 : index
    %45 = vector.load %arg7[%c8, %c0_25] : memref<16x128xf32, #tpu.memory_space<vmem>>, vector<4x128xf32>
    %cst_26 = arith.constant dense<0.000000e+00> : vector<1x128xf32>
    %46 = tpu.matmul %44, %45, %cst_26 {dimension_numbers = #tpu.dot_dimension_numbers<[1], [0], [0], [1], [0, 0, 1, 1], [], []>} : vector<1x4xf32>, vector<4x128xf32>, vector<1x128xf32> -> vector<1x128xf32>
    %47 = arith.addf %43, %46 : vector<1x128xf32>
    %48 = vector.extract_strided_slice %35 {offsets = [3, 0], sizes = [1, 4], strides = [1, 1]} : vector<4x4xf32> to vector<1x4xf32>
    %c12 = arith.constant 12 : index
    %c0_27 = arith.constant 0 : index
    %49 = vector.load %arg7[%c12, %c0_27] : memref<16x128xf32, #tpu.memory_space<vmem>>, vector<4x128xf32>
    %cst_28 = arith.constant dense<0.000000e+00> : vector<1x128xf32>
    %50 = tpu.matmul %48, %49, %cst_28 {dimension_numbers = #tpu.dot_dimension_numbers<[1], [0], [0], [1], [0, 0, 1, 1], [], []>} : vector<1x4xf32>, vector<4x128xf32>, vector<1x128xf32> -> vector<1x128xf32>
    %51 = arith.addf %47, %50 : vector<1x128xf32>
    %52 = vector.extract_strided_slice %0 {offsets = [1, 0, 0], sizes = [1, 1, 16], strides = [1, 1, 1]} : vector<2x2x16xf32> to vector<1x1x16xf32>
    %53 = vector.shape_cast %52 : vector<1x1x16xf32> to vector<1x16xf32>
    %54 = vector.extract_strided_slice %0 {offsets = [1, 1, 0], sizes = [1, 1, 16], strides = [1, 1, 1]} : vector<2x2x16xf32> to vector<1x1x16xf32>
    %55 = vector.shape_cast %54 : vector<1x1x16xf32> to vector<1x16xf32>
    %56 = vector.extract_strided_slice %53 {offsets = [0, 0], sizes = [1, 12], strides = [1, 1]} : vector<1x16xf32> to vector<1x12xf32>
    %57 = vector.extract_strided_slice %53 {offsets = [0, 1], sizes = [1, 12], strides = [1, 1]} : vector<1x16xf32> to vector<1x12xf32>
    %58 = vector.extract_strided_slice %53 {offsets = [0, 2], sizes = [1, 12], strides = [1, 1]} : vector<1x16xf32> to vector<1x12xf32>
    %59 = vector.extract_strided_slice %53 {offsets = [0, 3], sizes = [1, 12], strides = [1, 1]} : vector<1x16xf32> to vector<1x12xf32>
    %60 = vector.extract_strided_slice %53 {offsets = [0, 4], sizes = [1, 12], strides = [1, 1]} : vector<1x16xf32> to vector<1x12xf32>
    %61 = tpu.concatenate %56, %57, %58, %59, %60 in 0 : vector<1x12xf32>, vector<1x12xf32>, vector<1x12xf32>, vector<1x12xf32>, vector<1x12xf32> -> vector<5x12xf32>
    %62 = vector.extract_strided_slice %55 {offsets = [0, 0], sizes = [1, 12], strides = [1, 1]} : vector<1x16xf32> to vector<1x12xf32>
    %63 = vector.extract_strided_slice %55 {offsets = [0, 1], sizes = [1, 12], strides = [1, 1]} : vector<1x16xf32> to vector<1x12xf32>
    %64 = vector.extract_strided_slice %55 {offsets = [0, 2], sizes = [1, 12], strides = [1, 1]} : vector<1x16xf32> to vector<1x12xf32>
    %65 = vector.extract_strided_slice %55 {offsets = [0, 3], sizes = [1, 12], strides = [1, 1]} : vector<1x16xf32> to vector<1x12xf32>
    %66 = vector.extract_strided_slice %55 {offsets = [0, 4], sizes = [1, 12], strides = [1, 1]} : vector<1x16xf32> to vector<1x12xf32>
    %67 = tpu.concatenate %62, %63, %64, %65, %66 in 0 : vector<1x12xf32>, vector<1x12xf32>, vector<1x12xf32>, vector<1x12xf32>, vector<1x12xf32> -> vector<5x12xf32>
    %cst_29 = arith.constant dense<0.000000e+00> : vector<16x12xf32>
    %68 = tpu.matmul %1, %61, %cst_29 {dimension_numbers = #tpu.dot_dimension_numbers<[1], [0], [0], [1], [0, 0, 1, 1], [], []>} : vector<16x5xf32>, vector<5x12xf32>, vector<16x12xf32> -> vector<16x12xf32>
    %69 = vector.broadcast %2 : vector<16x1xf32> to vector<16x12xf32>
    %70 = arith.addf %68, %69 : vector<16x12xf32>
    %cst_30 = arith.constant 0.000000e+00 : f32
    %71 = vector.broadcast %cst_30 : f32 to vector<16x12xf32>
    %72 = arith.maximumf %70, %71 : vector<16x12xf32>
    %cst_31 = arith.constant dense<0.000000e+00> : vector<16x12xf32>
    %73 = tpu.matmul %3, %67, %cst_31 {dimension_numbers = #tpu.dot_dimension_numbers<[1], [0], [0], [1], [0, 0, 1, 1], [], []>} : vector<16x5xf32>, vector<5x12xf32>, vector<16x12xf32> -> vector<16x12xf32>
    %74 = vector.broadcast %4 : vector<16x1xf32> to vector<16x12xf32>
    %75 = arith.addf %73, %74 : vector<16x12xf32>
    %cst_32 = arith.constant 0.000000e+00 : f32
    %76 = vector.broadcast %cst_32 : f32 to vector<16x12xf32>
    %77 = arith.maximumf %75, %76 : vector<16x12xf32>
    %cst_33 = arith.constant dense<0.000000e+00> : vector<4x12xf32>
    %78 = tpu.matmul %5, %72, %cst_33 {dimension_numbers = #tpu.dot_dimension_numbers<[1], [0], [0], [1], [0, 0, 1, 1], [], []>} : vector<4x16xf32>, vector<16x12xf32>, vector<4x12xf32> -> vector<4x12xf32>
    %cst_34 = arith.constant dense<0.000000e+00> : vector<4x12xf32>
    %79 = tpu.matmul %5, %77, %cst_34 {dimension_numbers = #tpu.dot_dimension_numbers<[1], [0], [0], [1], [0, 0, 1, 1], [], []>} : vector<4x16xf32>, vector<16x12xf32>, vector<4x12xf32> -> vector<4x12xf32>
    %cst_35 = arith.constant dense<0.000000e+00> : vector<4x4xf32>
    %80 = tpu.matmul %78, %79, %cst_35 {dimension_numbers = #tpu.dot_dimension_numbers<[1], [1], [0], [0], [0, 0, 1, 0], [], []>} : vector<4x12xf32>, vector<4x12xf32>, vector<4x4xf32> -> vector<4x4xf32>
    %81 = vector.extract_strided_slice %80 {offsets = [0, 0], sizes = [1, 4], strides = [1, 1]} : vector<4x4xf32> to vector<1x4xf32>
    %c0_36 = arith.constant 0 : index
    %c0_37 = arith.constant 0 : index
    %82 = vector.load %arg7[%c0_36, %c0_37] : memref<16x128xf32, #tpu.memory_space<vmem>>, vector<4x128xf32>
    %cst_38 = arith.constant dense<0.000000e+00> : vector<1x128xf32>
    %83 = tpu.matmul %81, %82, %cst_38 {dimension_numbers = #tpu.dot_dimension_numbers<[1], [0], [0], [1], [0, 0, 1, 1], [], []>} : vector<1x4xf32>, vector<4x128xf32>, vector<1x128xf32> -> vector<1x128xf32>
    %84 = arith.addf %6, %83 : vector<1x128xf32>
    %85 = vector.extract_strided_slice %80 {offsets = [1, 0], sizes = [1, 4], strides = [1, 1]} : vector<4x4xf32> to vector<1x4xf32>
    %c4_39 = arith.constant 4 : index
    %c0_40 = arith.constant 0 : index
    %86 = vector.load %arg7[%c4_39, %c0_40] : memref<16x128xf32, #tpu.memory_space<vmem>>, vector<4x128xf32>
    %cst_41 = arith.constant dense<0.000000e+00> : vector<1x128xf32>
    %87 = tpu.matmul %85, %86, %cst_41 {dimension_numbers = #tpu.dot_dimension_numbers<[1], [0], [0], [1], [0, 0, 1, 1], [], []>} : vector<1x4xf32>, vector<4x128xf32>, vector<1x128xf32> -> vector<1x128xf32>
    %88 = arith.addf %84, %87 : vector<1x128xf32>
    %89 = vector.extract_strided_slice %80 {offsets = [2, 0], sizes = [1, 4], strides = [1, 1]} : vector<4x4xf32> to vector<1x4xf32>
    %c8_42 = arith.constant 8 : index
    %c0_43 = arith.constant 0 : index
    %90 = vector.load %arg7[%c8_42, %c0_43] : memref<16x128xf32, #tpu.memory_space<vmem>>, vector<4x128xf32>
    %cst_44 = arith.constant dense<0.000000e+00> : vector<1x128xf32>
    %91 = tpu.matmul %89, %90, %cst_44 {dimension_numbers = #tpu.dot_dimension_numbers<[1], [0], [0], [1], [0, 0, 1, 1], [], []>} : vector<1x4xf32>, vector<4x128xf32>, vector<1x128xf32> -> vector<1x128xf32>
    %92 = arith.addf %88, %91 : vector<1x128xf32>
    %93 = vector.extract_strided_slice %80 {offsets = [3, 0], sizes = [1, 4], strides = [1, 1]} : vector<4x4xf32> to vector<1x4xf32>
    %c12_45 = arith.constant 12 : index
    %c0_46 = arith.constant 0 : index
    %94 = vector.load %arg7[%c12_45, %c0_46] : memref<16x128xf32, #tpu.memory_space<vmem>>, vector<4x128xf32>
    %cst_47 = arith.constant dense<0.000000e+00> : vector<1x128xf32>
    %95 = tpu.matmul %93, %94, %cst_47 {dimension_numbers = #tpu.dot_dimension_numbers<[1], [0], [0], [1], [0, 0, 1, 1], [], []>} : vector<1x4xf32>, vector<4x128xf32>, vector<1x128xf32> -> vector<1x128xf32>
    %96 = arith.addf %92, %95 : vector<1x128xf32>
    %97 = tpu.concatenate %51, %96 in 0 : vector<1x128xf32>, vector<1x128xf32> -> vector<2x128xf32>
    %c0_48 = arith.constant 0 : index
    %c0_49 = arith.constant 0 : index
    %98 = vector.load %arg9[%c0_48, %c0_49] : memref<2x128xf32, #tpu.memory_space<vmem>>, vector<2x128xf32>
    tpu.vector_store %arg9[%c0_48, %c0_49], %97 {strides = array<i32>} : memref<2x128xf32, #tpu.memory_space<vmem>>, vector<2x128xf32>,
    return
  }
  func.func @transform_0(%arg0: i32) -> (i32, i32, i32) {
    %c0_i32 = arith.constant 0 : i32
    %c0_i32_0 = arith.constant 0 : i32
    %c0_i32_1 = arith.constant 0 : i32
    %c0_i32_2 = arith.constant 0 : i32
    return %c0_i32, %c0_i32_0, %c0_i32_1 : i32, i32, i32
  }
  func.func @transform_1(%arg0: i32) -> (i32, i32) {
    %c0_i32 = arith.constant 0 : i32
    %c0_i32_0 = arith.constant 0 : i32
    %c0_i32_1 = arith.constant 0 : i32
    return %c0_i32, %c0_i32_0 : i32, i32
  }
  func.func @transform_2(%arg0: i32) -> (i32, i32) {
    %c0_i32 = arith.constant 0 : i32
    %c0_i32_0 = arith.constant 0 : i32
    %c0_i32_1 = arith.constant 0 : i32
    return %c0_i32, %c0_i32_0 : i32, i32
  }
  func.func @transform_3(%arg0: i32) -> (i32, i32) {
    %c0_i32 = arith.constant 0 : i32
    %c0_i32_0 = arith.constant 0 : i32
    %c0_i32_1 = arith.constant 0 : i32
    return %c0_i32, %c0_i32_0 : i32, i32
  }
  func.func @transform_4(%arg0: i32) -> (i32, i32) {
    %c0_i32 = arith.constant 0 : i32
    %c0_i32_0 = arith.constant 0 : i32
    %c0_i32_1 = arith.constant 0 : i32
    return %c0_i32, %c0_i32_0 : i32, i32
  }
  func.func @transform_5(%arg0: i32) -> (i32, i32) {
    %c0_i32 = arith.constant 0 : i32
    %c0_i32_0 = arith.constant 0 : i32
    %c0_i32_1 = arith.constant 0 : i32
    return %c0_i32, %c0_i32_0 : i32, i32
  }
  func.func @transform_6(%arg0: i32) -> (i32, i32) {
    %c0_i32 = arith.constant 0 : i32
    %c0_i32_0 = arith.constant 0 : i32
    %c0_i32_1 = arith.constant 0 : i32
    return %c0_i32, %c0_i32_0 : i32, i32
  }
  func.func @transform_7(%arg0: i32) -> (i32, i32) {
    %c0_i32 = arith.constant 0 : i32
    %c0_i32_0 = arith.constant 0 : i32
    %c0_i32_1 = arith.constant 0 : i32
    return %c0_i32, %c0_i32_0 : i32, i32
  }
  func.func @transform_8(%arg0: i32) -> (i32, i32) {
    %c0_i32 = arith.constant 0 : i32
    %c0_i32_0 = arith.constant 0 : i32
    %c0_i32_1 = arith.constant 0 : i32
    return %c0_i32, %c0_i32_0 : i32, i32
  }
}

</mosaic_0001>

<llo_original>
// kernel: tpu_custom_call.1
$region0: #{tpu_custom_call.1}
  #allocation0 [shape = 'u32[]', space=smem, size = 0x4, offset = 0x4, fixed_abs, tag = 'smem constant byte address 0x4 - core index']
  #allocation1 [shape = 'u32[144,128]{1,0:T(1,128)}', space=vmem, size = 0x12000, scoped, tag = 'internal scratch']
  %s0 = inlined_call_operand.vmem [shape: f32[2,2,16], index: 0, kind: input, shape index: {}]
  %s1 = inlined_call_operand.vmem [shape: f32[16,5], index: 1, kind: input, shape index: {}]
  %s2 = inlined_call_operand.vmem [shape: f32[16,1], index: 2, kind: input, shape index: {}]
  %s3 = inlined_call_operand.vmem [shape: f32[16,5], index: 3, kind: input, shape index: {}]
  %s4 = inlined_call_operand.vmem [shape: f32[16,1], index: 4, kind: input, shape index: {}]
  %s5 = inlined_call_operand.vmem [shape: f32[4,16], index: 5, kind: input, shape index: {}]
  %s6 = inlined_call_operand.vmem [shape: f32[16,128], index: 6, kind: input, shape index: {}]
  %s7 = inlined_call_operand.vmem [shape: f32[1,128], index: 7, kind: input, shape index: {}]
  %s8 = inlined_call_operand.hbm [shape: f32[2,128], index: 8, kind: output, shape index: {}]
  %s9 = sld [smem:[#allocation0]]
  $region42: #{tpu_custom_call.1} parent=0
    _
  %s11 = ssub.s32 1, %s9
  %s12 = scalar_select 0, %s11, %s9
  $region1: #{tpu_custom_call.1} parent=0
    #allocation2 [shape = 'u8[1024]{0}', space=vmem, size = 0x400, scoped, tag = 'output window, operand 0, single buffered']
    #allocation3 [shape = 's32[1]{0}', space=sflag, size = 0x4, scoped, tag = 'scoped memory for tpu_custom_call.1']
    %13 = vsyncpa [#allocation3], 0
    // Predicated region
    $region2: #{tpu_custom_call.1} parent=1 // pred_check
      _
    $region3: #{tpu_custom_call.1} parent=1 // pred_check_branch
      %15 = sbr.rel (0) target = $region5
    $region4: #{tpu_custom_call.1} parent=1 // pred_region
      _
    $region5: #{tpu_custom_call.1} parent=1 // pred_fallthru
      _
    // Predicated region
    $region6: #{tpu_custom_call.1} parent=1 // pred_check
      _
    $region7: #{tpu_custom_call.1} parent=1 // pred_check_branch
      %17 = sbr.rel (0) target = $region9
    $region8: #{tpu_custom_call.1} parent=1 // pred_region
      _
    $region9: #{tpu_custom_call.1} parent=1 // pred_fallthru
      _
    // Predicated region
    $region10: #{tpu_custom_call.1} parent=1 // pred_check
      _
    $region11: #{tpu_custom_call.1} parent=1 // pred_check_branch
      %19 = sbr.rel (0) target = $region13
    $region12: #{tpu_custom_call.1} parent=1 // pred_region
      _
    $region13: #{tpu_custom_call.1} parent=1 // pred_fallthru
      _
    // Predicated region
    $region14: #{tpu_custom_call.1} parent=1 // pred_check
      _
    $region15: #{tpu_custom_call.1} parent=1 // pred_check_branch
      %21 = sbr.rel (0) target = $region17
    $region16: #{tpu_custom_call.1} parent=1 // pred_region
      _
    $region17: #{tpu_custom_call.1} parent=1 // pred_fallthru
      _
    // Predicated region
    $region18: #{tpu_custom_call.1} parent=1 // pred_check
      _
    $region19: #{tpu_custom_call.1} parent=1 // pred_check_branch
      %23 = sbr.rel (0) target = $region21
    $region20: #{tpu_custom_call.1} parent=1 // pred_region
      _
    $region21: #{tpu_custom_call.1} parent=1 // pred_fallthru
      _
    // Predicated region
    $region22: #{tpu_custom_call.1} parent=1 // pred_check
      _
    $region23: #{tpu_custom_call.1} parent=1 // pred_check_branch
      %25 = sbr.rel (0) target = $region25
    $region24: #{tpu_custom_call.1} parent=1 // pred_region
      _
    $region25: #{tpu_custom_call.1} parent=1 // pred_fallthru
      _
    // Predicated region
    $region26: #{tpu_custom_call.1} parent=1 // pred_check
      _
    $region27: #{tpu_custom_call.1} parent=1 // pred_check_branch
      %27 = sbr.rel (0) target = $region29
    $region28: #{tpu_custom_call.1} parent=1 // pred_region
      _
    $region29: #{tpu_custom_call.1} parent=1 // pred_fallthru
      _
    // Predicated region
    $region30: #{tpu_custom_call.1} parent=1 // pred_check
      _
    $region31: #{tpu_custom_call.1} parent=1 // pred_check_branch
      %29 = sbr.rel (0) target = $region33
    $region32: #{tpu_custom_call.1} parent=1 // pred_region
      _
    $region33: #{tpu_custom_call.1} parent=1 // pred_fallthru
      _
    %v30 = vld [vmem:[%s0] sm:$0x3]
    %v31 = vld [vmem:[%s0 + $0x2] sm:$0x3]
    %v32 = vld [vmem:[%s1] sm:$0xff]
    %v33 = vld [vmem:[%s1 + $0x8] sm:$0xff]
    %v34 = vld [vmem:[%s2] sm:$0xff]
    %v35 = vld [vmem:[%s2 + $0x8] sm:$0xff]
    %v36 = vld [vmem:[%s3] sm:$0xff]
    %v37 = vld [vmem:[%s3 + $0x8] sm:$0xff]
    %v38 = vld [vmem:[%s4] sm:$0xff]
    %v39 = vld [vmem:[%s4 + $0x8] sm:$0xff]
    %v40 = vld [vmem:[%s5] sm:$0xf]
    %v41 = vld [vmem:[%s7] sm:$0x1]
    %v43 = vrot.slane %v30, 7
    %44 = vrot.lane.b32.xlu0 %v43, 127
    %v45 = vpop.permute.xlu0 %44
    %v47 = vrot.slane %v30, 6
    %48 = vrot.lane.b32.xlu0 %v47, 126
    %v49 = vpop.permute.xlu0 %48
    %v51 = vrot.slane %v30, 5
    %52 = vrot.lane.b32.xlu0 %v51, 125
    %v53 = vpop.permute.xlu0 %52
    %v55 = vrot.slane %v30, 4
    %56 = vrot.lane.b32.xlu0 %v55, 124
    %v57 = vpop.permute.xlu0 %56
    %vm59 = vcmask 1040384
    %v60 = vsel %vm59, %v30, %v45
    %vm61 = vcmask 1041408
    %v62 = vsel %vm61, %v60, %v49
    %vm63 = vcmask 1042432
    %v64 = vsel %vm63, %v62, %v53
    %vm65 = vcmask 1043456
    %v66 = vsel %vm65, %v64, %v57
    %v67 = vrot.slane %v30, 1
    %69 = vrot.lane.b32.xlu0 %v30, 127
    %v70 = vpop.permute.xlu0 %69
    %72 = vrot.lane.b32.xlu0 %v43, 126
    %v73 = vpop.permute.xlu0 %72
    %75 = vrot.lane.b32.xlu0 %v47, 125
    %v76 = vpop.permute.xlu0 %75
    %78 = vrot.lane.b32.xlu0 %v51, 124
    %v79 = vpop.permute.xlu0 %78
    %v81 = vsel %vm59, %v67, %v70
    %v82 = vsel %vm61, %v81, %v73
    %v83 = vsel %vm63, %v82, %v76
    %v84 = vsel %vm65, %v83, %v79
    %86 = vset.pattern.permute.xlu0 0
    %87 = vperm.xlu0 %86, %v34
    %v88 = vpop.permute.xlu0 %87
    %91 = vset.pattern.permute.xlu0 0
    %92 = vperm.xlu0 %91, %v35
    %v93 = vpop.permute.xlu0 %92
    %vm95 = vcmask 39936
    %v97 = vsel %vm95, %v32, 0
    %v100 = vsel %vm95, %v33, 0
    %vm102 = vcmask 1044480
    %v104 = vsel %vm102, %v66, 0
    %106 = vmatprep.subr.mxu0 0.0
    %107 = vmatpush1.msra.mxu0 %v104
    %108 = vmatprep.subr.mxu0 0.0
    %109 = vmatpush1.msra.mxu0 0.0
    %110 = vmatprep.subr.mxu0 0.0
    %111 = vmatpush1.msra.mxu0 0.0
    %112 = vmatprep.subr.mxu0 0.0
    %113 = vmatpush1.msra.mxu0 0.0
    %114 = vmatprep.subr.mxu0 0.0
    %115 = vmatpush1.msra.mxu0 0.0
    %116 = vmatprep.subr.mxu0 0.0
    %117 = vmatpush1.msra.mxu0 0.0
    %118 = vmatprep.subr.mxu0 0.0
    %119 = vmatpush1.msra.mxu0 0.0
    %120 = vmatprep.subr.mxu0 0.0
    %121 = vmatpush1.msra.mxu0 0.0
    %122 = vmatprep.subr.mxu0 0.0
    %123 = vmatpush1.msra.mxu0 0.0
    %124 = vmatprep.subr.mxu0 0.0
    %125 = vmatpush1.msra.mxu0 0.0
    %126 = vmatprep.subr.mxu0 0.0
    %127 = vmatpush1.msra.mxu0 0.0
    %128 = vmatprep.subr.mxu0 0.0
    %129 = vmatpush1.msra.mxu0 0.0
    %130 = vmatprep.subr.mxu0 0.0
    %131 = vmatpush1.msra.mxu0 0.0
    %132 = vmatprep.subr.mxu0 0.0
    %133 = vmatpush1.msra.mxu0 0.0
    %134 = vmatprep.subr.mxu0 0.0
    %135 = vmatpush1.msra.mxu0 0.0
    %136 = vmatprep.subr.mxu0 0.0
    %137 = vmatpush1.msra.mxu0 0.0
    %138 = vmatprep.subr.mxu0 0.0
    %139 = vmatpush1.msra.mxu0 0.0
    %140 = vmatprep.subr.mxu0 0.0
    %141 = vmatpush1.msra.mxu0 0.0
    %142 = vmatprep.subr.mxu0 0.0
    %143 = vmatpush1.msra.mxu0 0.0
    %144 = vmatprep.subr.mxu0 0.0
    %145 = vmatpush1.msra.mxu0 0.0
    %146 = vmatprep.subr.mxu0 0.0
    %147 = vmatpush1.msra.mxu0 0.0
    %148 = vmatprep.subr.mxu0 0.0
    %149 = vmatpush1.msra.mxu0 0.0
    %150 = vmatprep.subr.mxu0 0.0
    %151 = vmatpush1.msra.mxu0 0.0
    %152 = vmatprep.subr.mxu0 0.0
    %153 = vmatpush1.msra.mxu0 0.0
    %154 = vmatprep.subr.mxu0 0.0
    %155 = vmatpush1.msra.mxu0 0.0
    %156 = vmatprep.subr.mxu0 0.0
    %157 = vmatpush1.msra.mxu0 0.0
    %158 = vmatprep.subr.mxu0 0.0
    %159 = vmatpush1.msra.mxu0 0.0
    %160 = vmatprep.subr.mxu0 0.0
    %161 = vmatpush1.msra.mxu0 0.0
    %162 = vmatprep.subr.mxu0 0.0
    %163 = vmatpush1.msra.mxu0 0.0
    %164 = vmatprep.subr.mxu0 0.0
    %165 = vmatpush1.msra.mxu0 0.0
    %166 = vmatprep.subr.mxu0 0.0
    %167 = vmatpush1.msra.mxu0 0.0
    %168 = vmatprep.subr.mxu0 0.0
    %169 = vmatpush1.msra.mxu0 0.0
    %170 = vmatprep.mubr.f32.mxu0 0.0
    %171 = vmatmul.mubr.f32.gmra.mrb[0].mxu0 %v97
    %v172 = vpop.f32.mrb[0].mxu0
    %v173 = vadd.f32 %v88, %v172
    %v174 = vpop.f32.mrb[0].mxu0
    %175 = vmatprep.mubr.f32.mxu0 0.0
    %176 = vmatmul.mubr.f32.gmra.mrb[0].mxu0 %v100
    %v177 = vpop.f32.mrb[0].mxu0
    %v178 = vadd.f32 %v93, %v177
    %v179 = vpop.f32.mrb[0].mxu0
    %180 = vdwg.mxu0
    %v181 = vmax.f32 %v173, 0.0
    %v182 = vmax.f32 %v178, 0.0
    %184 = vset.pattern.permute.xlu0 0
    %185 = vperm.xlu0 %184, %v38
    %v186 = vpop.permute.xlu0 %185
    %189 = vset.pattern.permute.xlu0 0
    %190 = vperm.xlu0 %189, %v39
    %v191 = vpop.permute.xlu0 %190
    %v194 = vsel %vm95, %v36, 0
    %v197 = vsel %vm95, %v37, 0
    %v200 = vsel %vm102, %v84, 0
    %202 = vmatprep.subr.mxu0 0.0
    %203 = vmatpush1.msra.mxu0 %v200
    %204 = vmatprep.subr.mxu0 0.0
    %205 = vmatpush1.msra.mxu0 0.0
    %206 = vmatprep.subr.mxu0 0.0
    %207 = vmatpush1.msra.mxu0 0.0
    %208 = vmatprep.subr.mxu0 0.0
    %209 = vmatpush1.msra.mxu0 0.0
    %210 = vmatprep.subr.mxu0 0.0
    %211 = vmatpush1.msra.mxu0 0.0
    %212 = vmatprep.subr.mxu0 0.0
    %213 = vmatpush1.msra.mxu0 0.0
    %214 = vmatprep.subr.mxu0 0.0
    %215 = vmatpush1.msra.mxu0 0.0
    %216 = vmatprep.subr.mxu0 0.0
    %217 = vmatpush1.msra.mxu0 0.0
    %218 = vmatprep.subr.mxu0 0.0
    %219 = vmatpush1.msra.mxu0 0.0
    %220 = vmatprep.subr.mxu0 0.0
    %221 = vmatpush1.msra.mxu0 0.0
    %222 = vmatprep.subr.mxu0 0.0
    %223 = vmatpush1.msra.mxu0 0.0
    %224 = vmatprep.subr.mxu0 0.0
    %225 = vmatpush1.msra.mxu0 0.0
    %226 = vmatprep.subr.mxu0 0.0
    %227 = vmatpush1.msra.mxu0 0.0
    %228 = vmatprep.subr.mxu0 0.0
    %229 = vmatpush1.msra.mxu0 0.0
    %230 = vmatprep.subr.mxu0 0.0
    %231 = vmatpush1.msra.mxu0 0.0
    %232 = vmatprep.subr.mxu0 0.0
    %233 = vmatpush1.msra.mxu0 0.0
    %234 = vmatprep.subr.mxu0 0.0
    %235 = vmatpush1.msra.mxu0 0.0
    %236 = vmatprep.subr.mxu0 0.0
    %237 = vmatpush1.msra.mxu0 0.0
    %238 = vmatprep.subr.mxu0 0.0
    %239 = vmatpush1.msra.mxu0 0.0
    %240 = vmatprep.subr.mxu0 0.0
    %241 = vmatpush1.msra.mxu0 0.0
    %242 = vmatprep.subr.mxu0 0.0
    %243 = vmatpush1.msra.mxu0 0.0
    %244 = vmatprep.subr.mxu0 0.0
    %245 = vmatpush1.msra.mxu0 0.0
    %246 = vmatprep.subr.mxu0 0.0
    %247 = vmatpush1.msra.mxu0 0.0
    %248 = vmatprep.subr.mxu0 0.0
    %249 = vmatpush1.msra.mxu0 0.0
    %250 = vmatprep.subr.mxu0 0.0
    %251 = vmatpush1.msra.mxu0 0.0
    %252 = vmatprep.subr.mxu0 0.0
    %253 = vmatpush1.msra.mxu0 0.0
    %254 = vmatprep.subr.mxu0 0.0
    %255 = vmatpush1.msra.mxu0 0.0
    %256 = vmatprep.subr.mxu0 0.0
    %257 = vmatpush1.msra.mxu0 0.0
    %258 = vmatprep.subr.mxu0 0.0
    %259 = vmatpush1.msra.mxu0 0.0
    %260 = vmatprep.subr.mxu0 0.0
    %261 = vmatpush1.msra.mxu0 0.0
    %262 = vmatprep.subr.mxu0 0.0
    %263 = vmatpush1.msra.mxu0 0.0
    %264 = vmatprep.subr.mxu0 0.0
    %265 = vmatpush1.msra.mxu0 0.0
    %266 = vmatprep.mubr.f32.mxu0 0.0
    %267 = vmatmul.mubr.f32.gmra.mrb[0].mxu0 %v194
    %v268 = vpop.f32.mrb[0].mxu0
    %v269 = vadd.f32 %v186, %v268
    %v270 = vpop.f32.mrb[0].mxu0
    %271 = vmatprep.mubr.f32.mxu0 0.0
    %272 = vmatmul.mubr.f32.gmra.mrb[0].mxu0 %v197
    %v273 = vpop.f32.mrb[0].mxu0
    %v274 = vadd.f32 %v191, %v273
    %v275 = vpop.f32.mrb[0].mxu0
    %276 = vdwg.mxu0
    %v277 = vmax.f32 %v269, 0.0
    %v278 = vmax.f32 %v274, 0.0
    %vm279 = vcmask 130048
    %v281 = vsel %vm279, %v40, 0
    %283 = vmatprep.subr.mxu0 0.0
    %284 = vmatpush1.msra.mxu0 %v181
    %285 = vmatprep.subr.mxu0 0.0
    %286 = vmatpush1.msra.mxu0 %v182
    %287 = vmatprep.subr.mxu0 0.0
    %288 = vmatpush1.msra.mxu0 0.0
    %289 = vmatprep.subr.mxu0 0.0
    %290 = vmatpush1.msra.mxu0 0.0
    %291 = vmatprep.subr.mxu0 0.0
    %292 = vmatpush1.msra.mxu0 0.0
    %293 = vmatprep.subr.mxu0 0.0
    %294 = vmatpush1.msra.mxu0 0.0
    %295 = vmatprep.subr.mxu0 0.0
    %296 = vmatpush1.msra.mxu0 0.0
    %297 = vmatprep.subr.mxu0 0.0
    %298 = vmatpush1.msra.mxu0 0.0
    %299 = vmatprep.subr.mxu0 0.0
    %300 = vmatpush1.msra.mxu0 0.0
    %301 = vmatprep.subr.mxu0 0.0
    %302 = vmatpush1.msra.mxu0 0.0
    %303 = vmatprep.subr.mxu0 0.0
    %304 = vmatpush1.msra.mxu0 0.0
    %305 = vmatprep.subr.mxu0 0.0
    %306 = vmatpush1.msra.mxu0 0.0
    %307 = vmatprep.subr.mxu0 0.0
    %308 = vmatpush1.msra.mxu0 0.0
    %309 = vmatprep.subr.mxu0 0.0
    %310 = vmatpush1.msra.mxu0 0.0
    %311 = vmatprep.subr.mxu0 0.0
    %312 = vmatpush1.msra.mxu0 0.0
    %313 = vmatprep.subr.mxu0 0.0
    %314 = vmatpush1.msra.mxu0 0.0
    %315 = vmatprep.subr.mxu0 0.0
    %316 = vmatpush1.msra.mxu0 0.0
    %317 = vmatprep.subr.mxu0 0.0
    %318 = vmatpush1.msra.mxu0 0.0
    %319 = vmatprep.subr.mxu0 0.0
    %320 = vmatpush1.msra.mxu0 0.0
    %321 = vmatprep.subr.mxu0 0.0
    %322 = vmatpush1.msra.mxu0 0.0
    %323 = vmatprep.subr.mxu0 0.0
    %324 = vmatpush1.msra.mxu0 0.0
    %325 = vmatprep.subr.mxu0 0.0
    %326 = vmatpush1.msra.mxu0 0.0
    %327 = vmatprep.subr.mxu0 0.0
    %328 = vmatpush1.msra.mxu0 0.0
    %329 = vmatprep.subr.mxu0 0.0
    %330 = vmatpush1.msra.mxu0 0.0
    %331 = vmatprep.subr.mxu0 0.0
    %332 = vmatpush1.msra.mxu0 0.0
    %333 = vmatprep.subr.mxu0 0.0
    %334 = vmatpush1.msra.mxu0 0.0
    %335 = vmatprep.subr.mxu0 0.0
    %336 = vmatpush1.msra.mxu0 0.0
    %337 = vmatprep.subr.mxu0 0.0
    %338 = vmatpush1.msra.mxu0 0.0
    %339 = vmatprep.subr.mxu0 0.0
    %340 = vmatpush1.msra.mxu0 0.0
    %341 = vmatprep.subr.mxu0 0.0
    %342 = vmatpush1.msra.mxu0 0.0
    %343 = vmatprep.subr.mxu0 0.0
    %344 = vmatpush1.msra.mxu0 0.0
    %345 = vmatprep.subr.mxu0 0.0
    %346 = vmatpush1.msra.mxu0 0.0
    %347 = vmatprep.mubr.f32.mxu0 0.0
    %348 = vmatmul.mubr.f32.gmra.mrb[0].mxu0 %v281
    %v349 = vpop.f32.mrb[0].mxu0
    %v350 = vadd.f32 0.0, %v349
    %v351 = vpop.f32.mrb[0].mxu0
    %352 = vdwg.mxu0
    %353 = vmatprep.subr.mxu0 0.0
    %354 = vmatpush1.msra.mxu0 %v277
    %355 = vmatprep.subr.mxu0 0.0
    %356 = vmatpush1.msra.mxu0 %v278
    %357 = vmatprep.subr.mxu0 0.0
    %358 = vmatpush1.msra.mxu0 0.0
    %359 = vmatprep.subr.mxu0 0.0
    %360 = vmatpush1.msra.mxu0 0.0
    %361 = vmatprep.subr.mxu0 0.0
    %362 = vmatpush1.msra.mxu0 0.0
    %363 = vmatprep.subr.mxu0 0.0
    %364 = vmatpush1.msra.mxu0 0.0
    %365 = vmatprep.subr.mxu0 0.0
    %366 = vmatpush1.msra.mxu0 0.0
    %367 = vmatprep.subr.mxu0 0.0
    %368 = vmatpush1.msra.mxu0 0.0
    %369 = vmatprep.subr.mxu0 0.0
    %370 = vmatpush1.msra.mxu0 0.0
    %371 = vmatprep.subr.mxu0 0.0
    %372 = vmatpush1.msra.mxu0 0.0
    %373 = vmatprep.subr.mxu0 0.0
    %374 = vmatpush1.msra.mxu0 0.0
    %375 = vmatprep.subr.mxu0 0.0
    %376 = vmatpush1.msra.mxu0 0.0
    %377 = vmatprep.subr.mxu0 0.0
    %378 = vmatpush1.msra.mxu0 0.0
    %379 = vmatprep.subr.mxu0 0.0
    %380 = vmatpush1.msra.mxu0 0.0
    %381 = vmatprep.subr.mxu0 0.0
    %382 = vmatpush1.msra.mxu0 0.0
    %383 = vmatprep.subr.mxu0 0.0
    %384 = vmatpush1.msra.mxu0 0.0
    %385 = vmatprep.subr.mxu0 0.0
    %386 = vmatpush1.msra.mxu0 0.0
    %387 = vmatprep.subr.mxu0 0.0
    %388 = vmatpush1.msra.mxu0 0.0
    %389 = vmatprep.subr.mxu0 0.0
    %390 = vmatpush1.msra.mxu0 0.0
    %391 = vmatprep.subr.mxu0 0.0
    %392 = vmatpush1.msra.mxu0 0.0
    %393 = vmatprep.subr.mxu0 0.0
    %394 = vmatpush1.msra.mxu0 0.0
    %395 = vmatprep.subr.mxu0 0.0
    %396 = vmatpush1.msra.mxu0 0.0
    %397 = vmatprep.subr.mxu0 0.0
    %398 = vmatpush1.msra.mxu0 0.0
    %399 = vmatprep.subr.mxu0 0.0
    %400 = vmatpush1.msra.mxu0 0.0
    %401 = vmatprep.subr.mxu0 0.0
    %402 = vmatpush1.msra.mxu0 0.0
    %403 = vmatprep.subr.mxu0 0.0
    %404 = vmatpush1.msra.mxu0 0.0
    %405 = vmatprep.subr.mxu0 0.0
    %406 = vmatpush1.msra.mxu0 0.0
    %407 = vmatprep.subr.mxu0 0.0
    %408 = vmatpush1.msra.mxu0 0.0
    %409 = vmatprep.subr.mxu0 0.0
    %410 = vmatpush1.msra.mxu0 0.0
    %411 = vmatprep.subr.mxu0 0.0
    %412 = vmatpush1.msra.mxu0 0.0
    %413 = vmatprep.subr.mxu0 0.0
    %414 = vmatpush1.msra.mxu0 0.0
    %415 = vmatprep.subr.mxu0 0.0
    %416 = vmatpush1.msra.mxu0 0.0
    %417 = vmatprep.mubr.f32.mxu0 0.0
    %418 = vmatmul.mubr.f32.gmra.mrb[0].mxu0 %v281
    %v419 = vpop.f32.mrb[0].mxu0
    %v420 = vadd.f32 0.0, %v419
    %v421 = vpop.f32.mrb[0].mxu0
    %422 = vdwg.mxu0
    %vm423 = vcmask 97280
    %v425 = vsel %vm423, %v350, 0
    %v428 = vsel %vm423, %v420, 0
    %430 = vmatprep.subr.mxu0 0.0
    %431 = vmatpush1.xpose.msra.mxu0 %v428
    %432 = vmatprep.subr.mxu0 0.0
    %433 = vmatpush1.xpose.msra.mxu0 0.0
    %434 = vmatprep.subr.mxu0 0.0
    %435 = vmatpush1.xpose.msra.mxu0 0.0
    %436 = vmatprep.subr.mxu0 0.0
    %437 = vmatpush1.xpose.msra.mxu0 0.0
    %438 = vmatprep.subr.mxu0 0.0
    %439 = vmatpush1.xpose.msra.mxu0 0.0
    %440 = vmatprep.subr.mxu0 0.0
    %441 = vmatpush1.xpose.msra.mxu0 0.0
    %442 = vmatprep.subr.mxu0 0.0
    %443 = vmatpush1.xpose.msra.mxu0 0.0
    %444 = vmatprep.subr.mxu0 0.0
    %445 = vmatpush1.xpose.msra.mxu0 0.0
    %446 = vmatprep.subr.mxu0 0.0
    %447 = vmatpush1.xpose.msra.mxu0 0.0
    %448 = vmatprep.subr.mxu0 0.0
    %449 = vmatpush1.xpose.msra.mxu0 0.0
    %450 = vmatprep.subr.mxu0 0.0
    %451 = vmatpush1.xpose.msra.mxu0 0.0
    %452 = vmatprep.subr.mxu0 0.0
    %453 = vmatpush1.xpose.msra.mxu0 0.0
    %454 = vmatprep.subr.mxu0 0.0
    %455 = vmatpush1.xpose.msra.mxu0 0.0
    %456 = vmatprep.subr.mxu0 0.0
    %457 = vmatpush1.xpose.msra.mxu0 0.0
    %458 = vmatprep.subr.mxu0 0.0
    %459 = vmatpush1.xpose.msra.mxu0 0.0
    %460 = vmatprep.subr.mxu0 0.0
    %461 = vmatpush1.xpose.msra.mxu0 0.0
    %462 = vmatprep.subr.mxu0 0.0
    %463 = vmatpush1.xpose.msra.mxu0 0.0
    %464 = vmatprep.subr.mxu0 0.0
    %465 = vmatpush1.xpose.msra.mxu0 0.0
    %466 = vmatprep.subr.mxu0 0.0
    %467 = vmatpush1.xpose.msra.mxu0 0.0
    %468 = vmatprep.subr.mxu0 0.0
    %469 = vmatpush1.xpose.msra.mxu0 0.0
    %470 = vmatprep.subr.mxu0 0.0
    %471 = vmatpush1.xpose.msra.mxu0 0.0
    %472 = vmatprep.subr.mxu0 0.0
    %473 = vmatpush1.xpose.msra.mxu0 0.0
    %474 = vmatprep.subr.mxu0 0.0
    %475 = vmatpush1.xpose.msra.mxu0 0.0
    %476 = vmatprep.subr.mxu0 0.0
    %477 = vmatpush1.xpose.msra.mxu0 0.0
    %478 = vmatprep.subr.mxu0 0.0
    %479 = vmatpush1.xpose.msra.mxu0 0.0
    %480 = vmatprep.subr.mxu0 0.0
    %481 = vmatpush1.xpose.msra.mxu0 0.0
    %482 = vmatprep.subr.mxu0 0.0
    %483 = vmatpush1.xpose.msra.mxu0 0.0
    %484 = vmatprep.subr.mxu0 0.0
    %485 = vmatpush1.xpose.msra.mxu0 0.0
    %486 = vmatprep.subr.mxu0 0.0
    %487 = vmatpush1.xpose.msra.mxu0 0.0
    %488 = vmatprep.subr.mxu0 0.0
    %489 = vmatpush1.xpose.msra.mxu0 0.0
    %490 = vmatprep.subr.mxu0 0.0
    %491 = vmatpush1.xpose.msra.mxu0 0.0
    %492 = vmatprep.subr.mxu0 0.0
    %493 = vmatpush1.xpose.msra.mxu0 0.0
    %494 = vmatprep.mubr.f32.mxu0 0.0
    %495 = vmatmul.mubr.f32.gmra.mrb[0].mxu0 %v425
    %v496 = vpop.f32.mrb[0].mxu0
    %v497 = vadd.f32 0.0, %v496
    %v498 = vpop.f32.mrb[0].mxu0
    %499 = vdwg.mxu0
    %v500 = vld [vmem:[%s6] sm:$0xf]
    %vm501 = vcmask 31744
    %v503 = vsel %vm501, %v497, 0
    %v506 = vsel %vm65, %v500, 0
    %508 = vmatprep.subr.mxu0 0.0
    %509 = vmatpush1.msra.mxu0 %v506
    %510 = vmatprep.subr.mxu0 0.0
    %511 = vmatpush1.msra.mxu0 0.0
    %512 = vmatprep.subr.mxu0 0.0
    %513 = vmatpush1.msra.mxu0 0.0
    %514 = vmatprep.subr.mxu0 0.0
    %515 = vmatpush1.msra.mxu0 0.0
    %516 = vmatprep.subr.mxu0 0.0
    %517 = vmatpush1.msra.mxu0 0.0
    %518 = vmatprep.subr.mxu0 0.0
    %519 = vmatpush1.msra.mxu0 0.0
    %520 = vmatprep.subr.mxu0 0.0
    %521 = vmatpush1.msra.mxu0 0.0
    %522 = vmatprep.subr.mxu0 0.0
    %523 = vmatpush1.msra.mxu0 0.0
    %524 = vmatprep.subr.mxu0 0.0
    %525 = vmatpush1.msra.mxu0 0.0
    %526 = vmatprep.subr.mxu0 0.0
    %527 = vmatpush1.msra.mxu0 0.0
    %528 = vmatprep.subr.mxu0 0.0
    %529 = vmatpush1.msra.mxu0 0.0
    %530 = vmatprep.subr.mxu0 0.0
    %531 = vmatpush1.msra.mxu0 0.0
    %532 = vmatprep.subr.mxu0 0.0
    %533 = vmatpush1.msra.mxu0 0.0
    %534 = vmatprep.subr.mxu0 0.0
    %535 = vmatpush1.msra.mxu0 0.0
    %536 = vmatprep.subr.mxu0 0.0
    %537 = vmatpush1.msra.mxu0 0.0
    %538 = vmatprep.subr.mxu0 0.0
    %539 = vmatpush1.msra.mxu0 0.0
    %540 = vmatprep.subr.mxu0 0.0
    %541 = vmatpush1.msra.mxu0 0.0
    %542 = vmatprep.subr.mxu0 0.0
    %543 = vmatpush1.msra.mxu0 0.0
    %544 = vmatprep.subr.mxu0 0.0
    %545 = vmatpush1.msra.mxu0 0.0
    %546 = vmatprep.subr.mxu0 0.0
    %547 = vmatpush1.msra.mxu0 0.0
    %548 = vmatprep.subr.mxu0 0.0
    %549 = vmatpush1.msra.mxu0 0.0
    %550 = vmatprep.subr.mxu0 0.0
    %551 = vmatpush1.msra.mxu0 0.0
    %552 = vmatprep.subr.mxu0 0.0
    %553 = vmatpush1.msra.mxu0 0.0
    %554 = vmatprep.subr.mxu0 0.0
    %555 = vmatpush1.msra.mxu0 0.0
    %556 = vmatprep.subr.mxu0 0.0
    %557 = vmatpush1.msra.mxu0 0.0
    %558 = vmatprep.subr.mxu0 0.0
    %559 = vmatpush1.msra.mxu0 0.0
    %560 = vmatprep.subr.mxu0 0.0
    %561 = vmatpush1.msra.mxu0 0.0
    %562 = vmatprep.subr.mxu0 0.0
    %563 = vmatpush1.msra.mxu0 0.0
    %564 = vmatprep.subr.mxu0 0.0
    %565 = vmatpush1.msra.mxu0 0.0
    %566 = vmatprep.subr.mxu0 0.0
    %567 = vmatpush1.msra.mxu0 0.0
    %568 = vmatprep.subr.mxu0 0.0
    %569 = vmatpush1.msra.mxu0 0.0
    %570 = vmatprep.subr.mxu0 0.0
    %571 = vmatpush1.msra.mxu0 0.0
    %572 = vmatprep.mubr.f32.mxu0 0.0
    %573 = vmatmul.mubr.f32.gmra.mrb[0].mxu0 %v503
    %v574 = vpop.f32.mrb[0].mxu0
    %v575 = vadd.f32 0.0, %v574
    %v576 = vpop.f32.mrb[0].mxu0
    %577 = vdwg.mxu0
    %v578 = vadd.f32 %v41, %v575
    %v579 = vld [vmem:[%s6 + $0x4] sm:$0xf]
    %v580 = vrot.slane %v497, 1
    %v581 = vsel %vm501, %v580, 0
    %v584 = vsel %vm65, %v579, 0
    %586 = vmatprep.subr.mxu0 0.0
    %587 = vmatpush1.msra.mxu0 %v584
    %588 = vmatprep.subr.mxu0 0.0
    %589 = vmatpush1.msra.mxu0 0.0
    %590 = vmatprep.subr.mxu0 0.0
    %591 = vmatpush1.msra.mxu0 0.0
    %592 = vmatprep.subr.mxu0 0.0
    %593 = vmatpush1.msra.mxu0 0.0
    %594 = vmatprep.subr.mxu0 0.0
    %595 = vmatpush1.msra.mxu0 0.0
    %596 = vmatprep.subr.mxu0 0.0
    %597 = vmatpush1.msra.mxu0 0.0
    %598 = vmatprep.subr.mxu0 0.0
    %599 = vmatpush1.msra.mxu0 0.0
    %600 = vmatprep.subr.mxu0 0.0
    %601 = vmatpush1.msra.mxu0 0.0
    %602 = vmatprep.subr.mxu0 0.0
    %603 = vmatpush1.msra.mxu0 0.0
    %604 = vmatprep.subr.mxu0 0.0
    %605 = vmatpush1.msra.mxu0 0.0
    %606 = vmatprep.subr.mxu0 0.0
    %607 = vmatpush1.msra.mxu0 0.0
    %608 = vmatprep.subr.mxu0 0.0
    %609 = vmatpush1.msra.mxu0 0.0
    %610 = vmatprep.subr.mxu0 0.0
    %611 = vmatpush1.msra.mxu0 0.0
    %612 = vmatprep.subr.mxu0 0.0
    %613 = vmatpush1.msra.mxu0 0.0
    %614 = vmatprep.subr.mxu0 0.0
    %615 = vmatpush1.msra.mxu0 0.0
    %616 = vmatprep.subr.mxu0 0.0
    %617 = vmatpush1.msra.mxu0 0.0
    %618 = vmatprep.subr.mxu0 0.0
    %619 = vmatpush1.msra.mxu0 0.0
    %620 = vmatprep.subr.mxu0 0.0
    %621 = vmatpush1.msra.mxu0 0.0
    %622 = vmatprep.subr.mxu0 0.0
    %623 = vmatpush1.msra.mxu0 0.0
    %624 = vmatprep.subr.mxu0 0.0
    %625 = vmatpush1.msra.mxu0 0.0
    %626 = vmatprep.subr.mxu0 0.0
    %627 = vmatpush1.msra.mxu0 0.0
    %628 = vmatprep.subr.mxu0 0.0
    %629 = vmatpush1.msra.mxu0 0.0
    %630 = vmatprep.subr.mxu0 0.0
    %631 = vmatpush1.msra.mxu0 0.0
    %632 = vmatprep.subr.mxu0 0.0
    %633 = vmatpush1.msra.mxu0 0.0
    %634 = vmatprep.subr.mxu0 0.0
    %635 = vmatpush1.msra.mxu0 0.0
    %636 = vmatprep.subr.mxu0 0.0
    %637 = vmatpush1.msra.mxu0 0.0
    %638 = vmatprep.subr.mxu0 0.0
    %639 = vmatpush1.msra.mxu0 0.0
    %640 = vmatprep.subr.mxu0 0.0
    %641 = vmatpush1.msra.mxu0 0.0
    %642 = vmatprep.subr.mxu0 0.0
    %643 = vmatpush1.msra.mxu0 0.0
    %644 = vmatprep.subr.mxu0 0.0
    %645 = vmatpush1.msra.mxu0 0.0
    %646 = vmatprep.subr.mxu0 0.0
    %647 = vmatpush1.msra.mxu0 0.0
    %648 = vmatprep.subr.mxu0 0.0
    %649 = vmatpush1.msra.mxu0 0.0
    %650 = vmatprep.mubr.f32.mxu0 0.0
    %651 = vmatmul.mubr.f32.gmra.mrb[0].mxu0 %v581
    %v652 = vpop.f32.mrb[0].mxu0
    %v653 = vadd.f32 0.0, %v652
    %v654 = vpop.f32.mrb[0].mxu0
    %655 = vdwg.mxu0
    %v656 = vadd.f32 %v578, %v653
    %v657 = vld [vmem:[%s6 + $0x8] sm:$0xf]
    %v658 = vrot.slane %v497, 2
    %v659 = vsel %vm501, %v658, 0
    %v662 = vsel %vm65, %v657, 0
    %664 = vmatprep.subr.mxu0 0.0
    %665 = vmatpush1.msra.mxu0 %v662
    %666 = vmatprep.subr.mxu0 0.0
    %667 = vmatpush1.msra.mxu0 0.0
    %668 = vmatprep.subr.mxu0 0.0
    %669 = vmatpush1.msra.mxu0 0.0
    %670 = vmatprep.subr.mxu0 0.0
    %671 = vmatpush1.msra.mxu0 0.0
    %672 = vmatprep.subr.mxu0 0.0
    %673 = vmatpush1.msra.mxu0 0.0
    %674 = vmatprep.subr.mxu0 0.0
    %675 = vmatpush1.msra.mxu0 0.0
    %676 = vmatprep.subr.mxu0 0.0
    %677 = vmatpush1.msra.mxu0 0.0
    %678 = vmatprep.subr.mxu0 0.0
    %679 = vmatpush1.msra.mxu0 0.0
    %680 = vmatprep.subr.mxu0 0.0
    %681 = vmatpush1.msra.mxu0 0.0
    %682 = vmatprep.subr.mxu0 0.0
    %683 = vmatpush1.msra.mxu0 0.0
    %684 = vmatprep.subr.mxu0 0.0
    %685 = vmatpush1.msra.mxu0 0.0
    %686 = vmatprep.subr.mxu0 0.0
    %687 = vmatpush1.msra.mxu0 0.0
    %688 = vmatprep.subr.mxu0 0.0
    %689 = vmatpush1.msra.mxu0 0.0
    %690 = vmatprep.subr.mxu0 0.0
    %691 = vmatpush1.msra.mxu0 0.0
    %692 = vmatprep.subr.mxu0 0.0
    %693 = vmatpush1.msra.mxu0 0.0
    %694 = vmatprep.subr.mxu0 0.0
    %695 = vmatpush1.msra.mxu0 0.0
    %696 = vmatprep.subr.mxu0 0.0
    %697 = vmatpush1.msra.mxu0 0.0
    %698 = vmatprep.subr.mxu0 0.0
    %699 = vmatpush1.msra.mxu0 0.0
    %700 = vmatprep.subr.mxu0 0.0
    %701 = vmatpush1.msra.mxu0 0.0
    %702 = vmatprep.subr.mxu0 0.0
    %703 = vmatpush1.msra.mxu0 0.0
    %704 = vmatprep.subr.mxu0 0.0
    %705 = vmatpush1.msra.mxu0 0.0
    %706 = vmatprep.subr.mxu0 0.0
    %707 = vmatpush1.msra.mxu0 0.0
    %708 = vmatprep.subr.mxu0 0.0
    %709 = vmatpush1.msra.mxu0 0.0
    %710 = vmatprep.subr.mxu0 0.0
    %711 = vmatpush1.msra.mxu0 0.0
    %712 = vmatprep.subr.mxu0 0.0
    %713 = vmatpush1.msra.mxu0 0.0
    %714 = vmatprep.subr.mxu0 0.0
    %715 = vmatpush1.msra.mxu0 0.0
    %716 = vmatprep.subr.mxu0 0.0
    %717 = vmatpush1.msra.mxu0 0.0
    %718 = vmatprep.subr.mxu0 0.0
    %719 = vmatpush1.msra.mxu0 0.0
    %720 = vmatprep.subr.mxu0 0.0
    %721 = vmatpush1.msra.mxu0 0.0
    %722 = vmatprep.subr.mxu0 0.0
    %723 = vmatpush1.msra.mxu0 0.0
    %724 = vmatprep.subr.mxu0 0.0
    %725 = vmatpush1.msra.mxu0 0.0
    %726 = vmatprep.subr.mxu0 0.0
    %727 = vmatpush1.msra.mxu0 0.0
    %728 = vmatprep.mubr.f32.mxu0 0.0
    %729 = vmatmul.mubr.f32.gmra.mrb[0].mxu0 %v659
    %v730 = vpop.f32.mrb[0].mxu0
    %v731 = vadd.f32 0.0, %v730
    %v732 = vpop.f32.mrb[0].mxu0
    %733 = vdwg.mxu0
    %v734 = vadd.f32 %v656, %v731
    %v735 = vld [vmem:[%s6 + $0xc] sm:$0xf]
    %v736 = vrot.slane %v497, 3
    %v737 = vsel %vm501, %v736, 0
    %v740 = vsel %vm65, %v735, 0
    %742 = vmatprep.subr.mxu0 0.0
    %743 = vmatpush1.msra.mxu0 %v740
    %744 = vmatprep.subr.mxu0 0.0
    %745 = vmatpush1.msra.mxu0 0.0
    %746 = vmatprep.subr.mxu0 0.0
    %747 = vmatpush1.msra.mxu0 0.0
    %748 = vmatprep.subr.mxu0 0.0
    %749 = vmatpush1.msra.mxu0 0.0
    %750 = vmatprep.subr.mxu0 0.0
    %751 = vmatpush1.msra.mxu0 0.0
    %752 = vmatprep.subr.mxu0 0.0
    %753 = vmatpush1.msra.mxu0 0.0
    %754 = vmatprep.subr.mxu0 0.0
    %755 = vmatpush1.msra.mxu0 0.0
    %756 = vmatprep.subr.mxu0 0.0
    %757 = vmatpush1.msra.mxu0 0.0
    %758 = vmatprep.subr.mxu0 0.0
    %759 = vmatpush1.msra.mxu0 0.0
    %760 = vmatprep.subr.mxu0 0.0
    %761 = vmatpush1.msra.mxu0 0.0
    %762 = vmatprep.subr.mxu0 0.0
    %763 = vmatpush1.msra.mxu0 0.0
    %764 = vmatprep.subr.mxu0 0.0
    %765 = vmatpush1.msra.mxu0 0.0
    %766 = vmatprep.subr.mxu0 0.0
    %767 = vmatpush1.msra.mxu0 0.0
    %768 = vmatprep.subr.mxu0 0.0
    %769 = vmatpush1.msra.mxu0 0.0
    %770 = vmatprep.subr.mxu0 0.0
    %771 = vmatpush1.msra.mxu0 0.0
    %772 = vmatprep.subr.mxu0 0.0
    %773 = vmatpush1.msra.mxu0 0.0
    %774 = vmatprep.subr.mxu0 0.0
    %775 = vmatpush1.msra.mxu0 0.0
    %776 = vmatprep.subr.mxu0 0.0
    %777 = vmatpush1.msra.mxu0 0.0
    %778 = vmatprep.subr.mxu0 0.0
    %779 = vmatpush1.msra.mxu0 0.0
    %780 = vmatprep.subr.mxu0 0.0
    %781 = vmatpush1.msra.mxu0 0.0
    %782 = vmatprep.subr.mxu0 0.0
    %783 = vmatpush1.msra.mxu0 0.0
    %784 = vmatprep.subr.mxu0 0.0
    %785 = vmatpush1.msra.mxu0 0.0
    %786 = vmatprep.subr.mxu0 0.0
    %787 = vmatpush1.msra.mxu0 0.0
    %788 = vmatprep.subr.mxu0 0.0
    %789 = vmatpush1.msra.mxu0 0.0
    %790 = vmatprep.subr.mxu0 0.0
    %791 = vmatpush1.msra.mxu0 0.0
    %792 = vmatprep.subr.mxu0 0.0
    %793 = vmatpush1.msra.mxu0 0.0
    %794 = vmatprep.subr.mxu0 0.0
    %795 = vmatpush1.msra.mxu0 0.0
    %796 = vmatprep.subr.mxu0 0.0
    %797 = vmatpush1.msra.mxu0 0.0
    %798 = vmatprep.subr.mxu0 0.0
    %799 = vmatpush1.msra.mxu0 0.0
    %800 = vmatprep.subr.mxu0 0.0
    %801 = vmatpush1.msra.mxu0 0.0
    %802 = vmatprep.subr.mxu0 0.0
    %803 = vmatpush1.msra.mxu0 0.0
    %804 = vmatprep.subr.mxu0 0.0
    %805 = vmatpush1.msra.mxu0 0.0
    %806 = vmatprep.mubr.f32.mxu0 0.0
    %807 = vmatmul.mubr.f32.gmra.mrb[0].mxu0 %v737
    %v808 = vpop.f32.mrb[0].mxu0
    %v809 = vadd.f32 0.0, %v808
    %v810 = vpop.f32.mrb[0].mxu0
    %811 = vdwg.mxu0
    %v812 = vadd.f32 %v734, %v809
    %v814 = vrot.slane %v31, 7
    %815 = vrot.lane.b32.xlu0 %v814, 127
    %v816 = vpop.permute.xlu0 %815
    %v818 = vrot.slane %v31, 6
    %819 = vrot.lane.b32.xlu0 %v818, 126
    %v820 = vpop.permute.xlu0 %819
    %v822 = vrot.slane %v31, 5
    %823 = vrot.lane.b32.xlu0 %v822, 125
    %v824 = vpop.permute.xlu0 %823
    %v826 = vrot.slane %v31, 4
    %827 = vrot.lane.b32.xlu0 %v826, 124
    %v828 = vpop.permute.xlu0 %827
    %v830 = vsel %vm59, %v31, %v816
    %v831 = vsel %vm61, %v830, %v820
    %v832 = vsel %vm63, %v831, %v824
    %v833 = vsel %vm65, %v832, %v828
    %v834 = vrot.slane %v31, 1
    %836 = vrot.lane.b32.xlu0 %v31, 127
    %v837 = vpop.permute.xlu0 %836
    %839 = vrot.lane.b32.xlu0 %v814, 126
    %v840 = vpop.permute.xlu0 %839
    %842 = vrot.lane.b32.xlu0 %v818, 125
    %v843 = vpop.permute.xlu0 %842
    %845 = vrot.lane.b32.xlu0 %v822, 124
    %v846 = vpop.permute.xlu0 %845
    %v848 = vsel %vm59, %v834, %v837
    %v849 = vsel %vm61, %v848, %v840
    %v850 = vsel %vm63, %v849, %v843
    %v851 = vsel %vm65, %v850, %v846
    %v853 = vsel %vm102, %v833, 0
    %855 = vmatprep.subr.mxu0 0.0
    %856 = vmatpush1.msra.mxu0 %v853
    %857 = vmatprep.subr.mxu0 0.0
    %858 = vmatpush1.msra.mxu0 0.0
    %859 = vmatprep.subr.mxu0 0.0
    %860 = vmatpush1.msra.mxu0 0.0
    %861 = vmatprep.subr.mxu0 0.0
    %862 = vmatpush1.msra.mxu0 0.0
    %863 = vmatprep.subr.mxu0 0.0
    %864 = vmatpush1.msra.mxu0 0.0
    %865 = vmatprep.subr.mxu0 0.0
    %866 = vmatpush1.msra.mxu0 0.0
    %867 = vmatprep.subr.mxu0 0.0
    %868 = vmatpush1.msra.mxu0 0.0
    %869 = vmatprep.subr.mxu0 0.0
    %870 = vmatpush1.msra.mxu0 0.0
    %871 = vmatprep.subr.mxu0 0.0
    %872 = vmatpush1.msra.mxu0 0.0
    %873 = vmatprep.subr.mxu0 0.0
    %874 = vmatpush1.msra.mxu0 0.0
    %875 = vmatprep.subr.mxu0 0.0
    %876 = vmatpush1.msra.mxu0 0.0
    %877 = vmatprep.subr.mxu0 0.0
    %878 = vmatpush1.msra.mxu0 0.0
    %879 = vmatprep.subr.mxu0 0.0
    %880 = vmatpush1.msra.mxu0 0.0
    %881 = vmatprep.subr.mxu0 0.0
    %882 = vmatpush1.msra.mxu0 0.0
    %883 = vmatprep.subr.mxu0 0.0
    %884 = vmatpush1.msra.mxu0 0.0
    %885 = vmatprep.subr.mxu0 0.0
    %886 = vmatpush1.msra.mxu0 0.0
    %887 = vmatprep.subr.mxu0 0.0
    %888 = vmatpush1.msra.mxu0 0.0
    %889 = vmatprep.subr.mxu0 0.0
    %890 = vmatpush1.msra.mxu0 0.0
    %891 = vmatprep.subr.mxu0 0.0
    %892 = vmatpush1.msra.mxu0 0.0
    %893 = vmatprep.subr.mxu0 0.0
    %894 = vmatpush1.msra.mxu0 0.0
    %895 = vmatprep.subr.mxu0 0.0
    %896 = vmatpush1.msra.mxu0 0.0
    %897 = vmatprep.subr.mxu0 0.0
    %898 = vmatpush1.msra.mxu0 0.0
    %899 = vmatprep.subr.mxu0 0.0
    %900 = vmatpush1.msra.mxu0 0.0
    %901 = vmatprep.subr.mxu0 0.0
    %902 = vmatpush1.msra.mxu0 0.0
    %903 = vmatprep.subr.mxu0 0.0
    %904 = vmatpush1.msra.mxu0 0.0
    %905 = vmatprep.subr.mxu0 0.0
    %906 = vmatpush1.msra.mxu0 0.0
    %907 = vmatprep.subr.mxu0 0.0
    %908 = vmatpush1.msra.mxu0 0.0
    %909 = vmatprep.subr.mxu0 0.0
    %910 = vmatpush1.msra.mxu0 0.0
    %911 = vmatprep.subr.mxu0 0.0
    %912 = vmatpush1.msra.mxu0 0.0
    %913 = vmatprep.subr.mxu0 0.0
    %914 = vmatpush1.msra.mxu0 0.0
    %915 = vmatprep.subr.mxu0 0.0
    %916 = vmatpush1.msra.mxu0 0.0
    %917 = vmatprep.subr.mxu0 0.0
    %918 = vmatpush1.msra.mxu0 0.0
    %919 = vmatprep.mubr.f32.mxu0 0.0
    %920 = vmatmul.mubr.f32.gmra.mrb[0].mxu0 %v97
    %v921 = vpop.f32.mrb[0].mxu0
    %v922 = vadd.f32 %v88, %v921
    %v923 = vpop.f32.mrb[0].mxu0
    %924 = vmatprep.mubr.f32.mxu0 0.0
    %925 = vmatmul.mubr.f32.gmra.mrb[0].mxu0 %v100
    %v926 = vpop.f32.mrb[0].mxu0
    %v927 = vadd.f32 %v93, %v926
    %v928 = vpop.f32.mrb[0].mxu0
    %929 = vdwg.mxu0
    %v930 = vmax.f32 %v922, 0.0
    %v931 = vmax.f32 %v927, 0.0
    %v933 = vsel %vm102, %v851, 0
    %935 = vmatprep.subr.mxu0 0.0
    %936 = vmatpush1.msra.mxu0 %v933
    %937 = vmatprep.subr.mxu0 0.0
    %938 = vmatpush1.msra.mxu0 0.0
    %939 = vmatprep.subr.mxu0 0.0
    %940 = vmatpush1.msra.mxu0 0.0
    %941 = vmatprep.subr.mxu0 0.0
    %942 = vmatpush1.msra.mxu0 0.0
    %943 = vmatprep.subr.mxu0 0.0
    %944 = vmatpush1.msra.mxu0 0.0
    %945 = vmatprep.subr.mxu0 0.0
    %946 = vmatpush1.msra.mxu0 0.0
    %947 = vmatprep.subr.mxu0 0.0
    %948 = vmatpush1.msra.mxu0 0.0
    %949 = vmatprep.subr.mxu0 0.0
    %950 = vmatpush1.msra.mxu0 0.0
    %951 = vmatprep.subr.mxu0 0.0
    %952 = vmatpush1.msra.mxu0 0.0
    %953 = vmatprep.subr.mxu0 0.0
    %954 = vmatpush1.msra.mxu0 0.0
    %955 = vmatprep.subr.mxu0 0.0
    %956 = vmatpush1.msra.mxu0 0.0
    %957 = vmatprep.subr.mxu0 0.0
    %958 = vmatpush1.msra.mxu0 0.0
    %959 = vmatprep.subr.mxu0 0.0
    %960 = vmatpush1.msra.mxu0 0.0
    %961 = vmatprep.subr.mxu0 0.0
    %962 = vmatpush1.msra.mxu0 0.0
    %963 = vmatprep.subr.mxu0 0.0
    %964 = vmatpush1.msra.mxu0 0.0
    %965 = vmatprep.subr.mxu0 0.0
    %966 = vmatpush1.msra.mxu0 0.0
    %967 = vmatprep.subr.mxu0 0.0
    %968 = vmatpush1.msra.mxu0 0.0
    %969 = vmatprep.subr.mxu0 0.0
    %970 = vmatpush1.msra.mxu0 0.0
    %971 = vmatprep.subr.mxu0 0.0
    %972 = vmatpush1.msra.mxu0 0.0
    %973 = vmatprep.subr.mxu0 0.0
    %974 = vmatpush1.msra.mxu0 0.0
    %975 = vmatprep.subr.mxu0 0.0
    %976 = vmatpush1.msra.mxu0 0.0
    %977 = vmatprep.subr.mxu0 0.0
    %978 = vmatpush1.msra.mxu0 0.0
    %979 = vmatprep.subr.mxu0 0.0
    %980 = vmatpush1.msra.mxu0 0.0
    %981 = vmatprep.subr.mxu0 0.0
    %982 = vmatpush1.msra.mxu0 0.0
    %983 = vmatprep.subr.mxu0 0.0
    %984 = vmatpush1.msra.mxu0 0.0
    %985 = vmatprep.subr.mxu0 0.0
    %986 = vmatpush1.msra.mxu0 0.0
    %987 = vmatprep.subr.mxu0 0.0
    %988 = vmatpush1.msra.mxu0 0.0
    %989 = vmatprep.subr.mxu0 0.0
    %990 = vmatpush1.msra.mxu0 0.0
    %991 = vmatprep.subr.mxu0 0.0
    %992 = vmatpush1.msra.mxu0 0.0
    %993 = vmatprep.subr.mxu0 0.0
    %994 = vmatpush1.msra.mxu0 0.0
    %995 = vmatprep.subr.mxu0 0.0
    %996 = vmatpush1.msra.mxu0 0.0
    %997 = vmatprep.subr.mxu0 0.0
    %998 = vmatpush1.msra.mxu0 0.0
    %999 = vmatprep.mubr.f32.mxu0 0.0
    %1000 = vmatmul.mubr.f32.gmra.mrb[0].mxu0 %v194
    %v1001 = vpop.f32.mrb[0].mxu0
    %v1002 = vadd.f32 %v186, %v1001
    %v1003 = vpop.f32.mrb[0].mxu0
    %1004 = vmatprep.mubr.f32.mxu0 0.0
    %1005 = vmatmul.mubr.f32.gmra.mrb[0].mxu0 %v197
    %v1006 = vpop.f32.mrb[0].mxu0
    %v1007 = vadd.f32 %v191, %v1006
    %v1008 = vpop.f32.mrb[0].mxu0
    %1009 = vdwg.mxu0
    %v1010 = vmax.f32 %v1002, 0.0
    %v1011 = vmax.f32 %v1007, 0.0
    %1012 = vmatprep.subr.mxu0 0.0
    %1013 = vmatpush1.msra.mxu0 %v930
    %1014 = vmatprep.subr.mxu0 0.0
    %1015 = vmatpush1.msra.mxu0 %v931
    %1016 = vmatprep.subr.mxu0 0.0
    %1017 = vmatpush1.msra.mxu0 0.0
    %1018 = vmatprep.subr.mxu0 0.0
    %1019 = vmatpush1.msra.mxu0 0.0
    %1020 = vmatprep.subr.mxu0 0.0
    %1021 = vmatpush1.msra.mxu0 0.0
    %1022 = vmatprep.subr.mxu0 0.0
    %1023 = vmatpush1.msra.mxu0 0.0
    %1024 = vmatprep.subr.mxu0 0.0
    %1025 = vmatpush1.msra.mxu0 0.0
    %1026 = vmatprep.subr.mxu0 0.0
    %1027 = vmatpush1.msra.mxu0 0.0
    %1028 = vmatprep.subr.mxu0 0.0
    %1029 = vmatpush1.msra.mxu0 0.0
    %1030 = vmatprep.subr.mxu0 0.0
    %1031 = vmatpush1.msra.mxu0 0.0
    %1032 = vmatprep.subr.mxu0 0.0
    %1033 = vmatpush1.msra.mxu0 0.0
    %1034 = vmatprep.subr.mxu0 0.0
    %1035 = vmatpush1.msra.mxu0 0.0
    %1036 = vmatprep.subr.mxu0 0.0
    %1037 = vmatpush1.msra.mxu0 0.0
    %1038 = vmatprep.subr.mxu0 0.0
    %1039 = vmatpush1.msra.mxu0 0.0
    %1040 = vmatprep.subr.mxu0 0.0
    %1041 = vmatpush1.msra.mxu0 0.0
    %1042 = vmatprep.subr.mxu0 0.0
    %1043 = vmatpush1.msra.mxu0 0.0
    %1044 = vmatprep.subr.mxu0 0.0
    %1045 = vmatpush1.msra.mxu0 0.0
    %1046 = vmatprep.subr.mxu0 0.0
    %1047 = vmatpush1.msra.mxu0 0.0
    %1048 = vmatprep.subr.mxu0 0.0
    %1049 = vmatpush1.msra.mxu0 0.0
    %1050 = vmatprep.subr.mxu0 0.0
    %1051 = vmatpush1.msra.mxu0 0.0
    %1052 = vmatprep.subr.mxu0 0.0
    %1053 = vmatpush1.msra.mxu0 0.0
    %1054 = vmatprep.subr.mxu0 0.0
    %1055 = vmatpush1.msra.mxu0 0.0
    %1056 = vmatprep.subr.mxu0 0.0
    %1057 = vmatpush1.msra.mxu0 0.0
    %1058 = vmatprep.subr.mxu0 0.0
    %1059 = vmatpush1.msra.mxu0 0.0
    %1060 = vmatprep.subr.mxu0 0.0
    %1061 = vmatpush1.msra.mxu0 0.0
    %1062 = vmatprep.subr.mxu0 0.0
    %1063 = vmatpush1.msra.mxu0 0.0
    %1064 = vmatprep.subr.mxu0 0.0
    %1065 = vmatpush1.msra.mxu0 0.0
    %1066 = vmatprep.subr.mxu0 0.0
    %1067 = vmatpush1.msra.mxu0 0.0
    %1068 = vmatprep.subr.mxu0 0.0
    %1069 = vmatpush1.msra.mxu0 0.0
    %1070 = vmatprep.subr.mxu0 0.0
    %1071 = vmatpush1.msra.mxu0 0.0
    %1072 = vmatprep.subr.mxu0 0.0
    %1073 = vmatpush1.msra.mxu0 0.0
    %1074 = vmatprep.subr.mxu0 0.0
    %1075 = vmatpush1.msra.mxu0 0.0
    %1076 = vmatprep.mubr.f32.mxu0 0.0
    %1077 = vmatmul.mubr.f32.gmra.mrb[0].mxu0 %v281
    %v1078 = vpop.f32.mrb[0].mxu0
    %v1079 = vadd.f32 0.0, %v1078
    %v1080 = vpop.f32.mrb[0].mxu0
    %1081 = vdwg.mxu0
    %1082 = vmatprep.subr.mxu0 0.0
    %1083 = vmatpush1.msra.mxu0 %v1010
    %1084 = vmatprep.subr.mxu0 0.0
    %1085 = vmatpush1.msra.mxu0 %v1011
    %1086 = vmatprep.subr.mxu0 0.0
    %1087 = vmatpush1.msra.mxu0 0.0
    %1088 = vmatprep.subr.mxu0 0.0
    %1089 = vmatpush1.msra.mxu0 0.0
    %1090 = vmatprep.subr.mxu0 0.0
    %1091 = vmatpush1.msra.mxu0 0.0
    %1092 = vmatprep.subr.mxu0 0.0
    %1093 = vmatpush1.msra.mxu0 0.0
    %1094 = vmatprep.subr.mxu0 0.0
    %1095 = vmatpush1.msra.mxu0 0.0
    %1096 = vmatprep.subr.mxu0 0.0
    %1097 = vmatpush1.msra.mxu0 0.0
    %1098 = vmatprep.subr.mxu0 0.0
    %1099 = vmatpush1.msra.mxu0 0.0
    %1100 = vmatprep.subr.mxu0 0.0
    %1101 = vmatpush1.msra.mxu0 0.0
    %1102 = vmatprep.subr.mxu0 0.0
    %1103 = vmatpush1.msra.mxu0 0.0
    %1104 = vmatprep.subr.mxu0 0.0
    %1105 = vmatpush1.msra.mxu0 0.0
    %1106 = vmatprep.subr.mxu0 0.0
    %1107 = vmatpush1.msra.mxu0 0.0
    %1108 = vmatprep.subr.mxu0 0.0
    %1109 = vmatpush1.msra.mxu0 0.0
    %1110 = vmatprep.subr.mxu0 0.0
    %1111 = vmatpush1.msra.mxu0 0.0
    %1112 = vmatprep.subr.mxu0 0.0
    %1113 = vmatpush1.msra.mxu0 0.0
    %1114 = vmatprep.subr.mxu0 0.0
    %1115 = vmatpush1.msra.mxu0 0.0
    %1116 = vmatprep.subr.mxu0 0.0
    %1117 = vmatpush1.msra.mxu0 0.0
    %1118 = vmatprep.subr.mxu0 0.0
    %1119 = vmatpush1.msra.mxu0 0.0
    %1120 = vmatprep.subr.mxu0 0.0
    %1121 = vmatpush1.msra.mxu0 0.0
    %1122 = vmatprep.subr.mxu0 0.0
    %1123 = vmatpush1.msra.mxu0 0.0
    %1124 = vmatprep.subr.mxu0 0.0
    %1125 = vmatpush1.msra.mxu0 0.0
    %1126 = vmatprep.subr.mxu0 0.0
    %1127 = vmatpush1.msra.mxu0 0.0
    %1128 = vmatprep.subr.mxu0 0.0
    %1129 = vmatpush1.msra.mxu0 0.0
    %1130 = vmatprep.subr.mxu0 0.0
    %1131 = vmatpush1.msra.mxu0 0.0
    %1132 = vmatprep.subr.mxu0 0.0
    %1133 = vmatpush1.msra.mxu0 0.0
    %1134 = vmatprep.subr.mxu0 0.0
    %1135 = vmatpush1.msra.mxu0 0.0
    %1136 = vmatprep.subr.mxu0 0.0
    %1137 = vmatpush1.msra.mxu0 0.0
    %1138 = vmatprep.subr.mxu0 0.0
    %1139 = vmatpush1.msra.mxu0 0.0
    %1140 = vmatprep.subr.mxu0 0.0
    %1141 = vmatpush1.msra.mxu0 0.0
    %1142 = vmatprep.subr.mxu0 0.0
    %1143 = vmatpush1.msra.mxu0 0.0
    %1144 = vmatprep.subr.mxu0 0.0
    %1145 = vmatpush1.msra.mxu0 0.0
    %1146 = vmatprep.mubr.f32.mxu0 0.0
    %1147 = vmatmul.mubr.f32.gmra.mrb[0].mxu0 %v281
    %v1148 = vpop.f32.mrb[0].mxu0
    %v1149 = vadd.f32 0.0, %v1148
    %v1150 = vpop.f32.mrb[0].mxu0
    %1151 = vdwg.mxu0
    %v1153 = vsel %vm423, %v1079, 0
    %v1156 = vsel %vm423, %v1149, 0
    %1158 = vmatprep.subr.mxu0 0.0
    %1159 = vmatpush1.xpose.msra.mxu0 %v1156
    %1160 = vmatprep.subr.mxu0 0.0
    %1161 = vmatpush1.xpose.msra.mxu0 0.0
    %1162 = vmatprep.subr.mxu0 0.0
    %1163 = vmatpush1.xpose.msra.mxu0 0.0
    %1164 = vmatprep.subr.mxu0 0.0
    %1165 = vmatpush1.xpose.msra.mxu0 0.0
    %1166 = vmatprep.subr.mxu0 0.0
    %1167 = vmatpush1.xpose.msra.mxu0 0.0
    %1168 = vmatprep.subr.mxu0 0.0
    %1169 = vmatpush1.xpose.msra.mxu0 0.0
    %1170 = vmatprep.subr.mxu0 0.0
    %1171 = vmatpush1.xpose.msra.mxu0 0.0
    %1172 = vmatprep.subr.mxu0 0.0
    %1173 = vmatpush1.xpose.msra.mxu0 0.0
    %1174 = vmatprep.subr.mxu0 0.0
    %1175 = vmatpush1.xpose.msra.mxu0 0.0
    %1176 = vmatprep.subr.mxu0 0.0
    %1177 = vmatpush1.xpose.msra.mxu0 0.0
    %1178 = vmatprep.subr.mxu0 0.0
    %1179 = vmatpush1.xpose.msra.mxu0 0.0
    %1180 = vmatprep.subr.mxu0 0.0
    %1181 = vmatpush1.xpose.msra.mxu0 0.0
    %1182 = vmatprep.subr.mxu0 0.0
    %1183 = vmatpush1.xpose.msra.mxu0 0.0
    %1184 = vmatprep.subr.mxu0 0.0
    %1185 = vmatpush1.xpose.msra.mxu0 0.0
    %1186 = vmatprep.subr.mxu0 0.0
    %1187 = vmatpush1.xpose.msra.mxu0 0.0
    %1188 = vmatprep.subr.mxu0 0.0
    %1189 = vmatpush1.xpose.msra.mxu0 0.0
    %1190 = vmatprep.subr.mxu0 0.0
    %1191 = vmatpush1.xpose.msra.mxu0 0.0
    %1192 = vmatprep.subr.mxu0 0.0
    %1193 = vmatpush1.xpose.msra.mxu0 0.0
    %1194 = vmatprep.subr.mxu0 0.0
    %1195 = vmatpush1.xpose.msra.mxu0 0.0
    %1196 = vmatprep.subr.mxu0 0.0
    %1197 = vmatpush1.xpose.msra.mxu0 0.0
    %1198 = vmatprep.subr.mxu0 0.0
    %1199 = vmatpush1.xpose.msra.mxu0 0.0
    %1200 = vmatprep.subr.mxu0 0.0
    %1201 = vmatpush1.xpose.msra.mxu0 0.0
    %1202 = vmatprep.subr.mxu0 0.0
    %1203 = vmatpush1.xpose.msra.mxu0 0.0
    %1204 = vmatprep.subr.mxu0 0.0
    %1205 = vmatpush1.xpose.msra.mxu0 0.0
    %1206 = vmatprep.subr.mxu0 0.0
    %1207 = vmatpush1.xpose.msra.mxu0 0.0
    %1208 = vmatprep.subr.mxu0 0.0
    %1209 = vmatpush1.xpose.msra.mxu0 0.0
    %1210 = vmatprep.subr.mxu0 0.0
    %1211 = vmatpush1.xpose.msra.mxu0 0.0
    %1212 = vmatprep.subr.mxu0 0.0
    %1213 = vmatpush1.xpose.msra.mxu0 0.0
    %1214 = vmatprep.subr.mxu0 0.0
    %1215 = vmatpush1.xpose.msra.mxu0 0.0
    %1216 = vmatprep.subr.mxu0 0.0
    %1217 = vmatpush1.xpose.msra.mxu0 0.0
    %1218 = vmatprep.subr.mxu0 0.0
    %1219 = vmatpush1.xpose.msra.mxu0 0.0
    %1220 = vmatprep.subr.mxu0 0.0
    %1221 = vmatpush1.xpose.msra.mxu0 0.0
    %1222 = vmatprep.mubr.f32.mxu0 0.0
    %1223 = vmatmul.mubr.f32.gmra.mrb[0].mxu0 %v1153
    %v1224 = vpop.f32.mrb[0].mxu0
    %v1225 = vadd.f32 0.0, %v1224
    %v1226 = vpop.f32.mrb[0].mxu0
    %1227 = vdwg.mxu0
    %v1229 = vsel %vm501, %v1225, 0
    %1231 = vmatprep.subr.mxu0 0.0
    %1232 = vmatpush1.msra.mxu0 %v506
    %1233 = vmatprep.subr.mxu0 0.0
    %1234 = vmatpush1.msra.mxu0 0.0
    %1235 = vmatprep.subr.mxu0 0.0
    %1236 = vmatpush1.msra.mxu0 0.0
    %1237 = vmatprep.subr.mxu0 0.0
    %1238 = vmatpush1.msra.mxu0 0.0
    %1239 = vmatprep.subr.mxu0 0.0
    %1240 = vmatpush1.msra.mxu0 0.0
    %1241 = vmatprep.subr.mxu0 0.0
    %1242 = vmatpush1.msra.mxu0 0.0
    %1243 = vmatprep.subr.mxu0 0.0
    %1244 = vmatpush1.msra.mxu0 0.0
    %1245 = vmatprep.subr.mxu0 0.0
    %1246 = vmatpush1.msra.mxu0 0.0
    %1247 = vmatprep.subr.mxu0 0.0
    %1248 = vmatpush1.msra.mxu0 0.0
    %1249 = vmatprep.subr.mxu0 0.0
    %1250 = vmatpush1.msra.mxu0 0.0
    %1251 = vmatprep.subr.mxu0 0.0
    %1252 = vmatpush1.msra.mxu0 0.0
    %1253 = vmatprep.subr.mxu0 0.0
    %1254 = vmatpush1.msra.mxu0 0.0
    %1255 = vmatprep.subr.mxu0 0.0
    %1256 = vmatpush1.msra.mxu0 0.0
    %1257 = vmatprep.subr.mxu0 0.0
    %1258 = vmatpush1.msra.mxu0 0.0
    %1259 = vmatprep.subr.mxu0 0.0
    %1260 = vmatpush1.msra.mxu0 0.0
    %1261 = vmatprep.subr.mxu0 0.0
    %1262 = vmatpush1.msra.mxu0 0.0
    %1263 = vmatprep.subr.mxu0 0.0
    %1264 = vmatpush1.msra.mxu0 0.0
    %1265 = vmatprep.subr.mxu0 0.0
    %1266 = vmatpush1.msra.mxu0 0.0
    %1267 = vmatprep.subr.mxu0 0.0
    %1268 = vmatpush1.msra.mxu0 0.0
    %1269 = vmatprep.subr.mxu0 0.0
    %1270 = vmatpush1.msra.mxu0 0.0
    %1271 = vmatprep.subr.mxu0 0.0
    %1272 = vmatpush1.msra.mxu0 0.0
    %1273 = vmatprep.subr.mxu0 0.0
    %1274 = vmatpush1.msra.mxu0 0.0
    %1275 = vmatprep.subr.mxu0 0.0
    %1276 = vmatpush1.msra.mxu0 0.0
    %1277 = vmatprep.subr.mxu0 0.0
    %1278 = vmatpush1.msra.mxu0 0.0
    %1279 = vmatprep.subr.mxu0 0.0
    %1280 = vmatpush1.msra.mxu0 0.0
    %1281 = vmatprep.subr.mxu0 0.0
    %1282 = vmatpush1.msra.mxu0 0.0
    %1283 = vmatprep.subr.mxu0 0.0
    %1284 = vmatpush1.msra.mxu0 0.0
    %1285 = vmatprep.subr.mxu0 0.0
    %1286 = vmatpush1.msra.mxu0 0.0
    %1287 = vmatprep.subr.mxu0 0.0
    %1288 = vmatpush1.msra.mxu0 0.0
    %1289 = vmatprep.subr.mxu0 0.0
    %1290 = vmatpush1.msra.mxu0 0.0
    %1291 = vmatprep.subr.mxu0 0.0
    %1292 = vmatpush1.msra.mxu0 0.0
    %1293 = vmatprep.subr.mxu0 0.0
    %1294 = vmatpush1.msra.mxu0 0.0
    %1295 = vmatprep.mubr.f32.mxu0 0.0
    %1296 = vmatmul.mubr.f32.gmra.mrb[0].mxu0 %v1229
    %v1297 = vpop.f32.mrb[0].mxu0
    %v1298 = vadd.f32 0.0, %v1297
    %v1299 = vpop.f32.mrb[0].mxu0
    %1300 = vdwg.mxu0
    %v1301 = vadd.f32 %v41, %v1298
    %v1302 = vrot.slane %v1225, 1
    %v1303 = vsel %vm501, %v1302, 0
    %1305 = vmatprep.subr.mxu0 0.0
    %1306 = vmatpush1.msra.mxu0 %v584
    %1307 = vmatprep.subr.mxu0 0.0
    %1308 = vmatpush1.msra.mxu0 0.0
    %1309 = vmatprep.subr.mxu0 0.0
    %1310 = vmatpush1.msra.mxu0 0.0
    %1311 = vmatprep.subr.mxu0 0.0
    %1312 = vmatpush1.msra.mxu0 0.0
    %1313 = vmatprep.subr.mxu0 0.0
    %1314 = vmatpush1.msra.mxu0 0.0
    %1315 = vmatprep.subr.mxu0 0.0
    %1316 = vmatpush1.msra.mxu0 0.0
    %1317 = vmatprep.subr.mxu0 0.0
    %1318 = vmatpush1.msra.mxu0 0.0
    %1319 = vmatprep.subr.mxu0 0.0
    %1320 = vmatpush1.msra.mxu0 0.0
    %1321 = vmatprep.subr.mxu0 0.0
    %1322 = vmatpush1.msra.mxu0 0.0
    %1323 = vmatprep.subr.mxu0 0.0
    %1324 = vmatpush1.msra.mxu0 0.0
    %1325 = vmatprep.subr.mxu0 0.0
    %1326 = vmatpush1.msra.mxu0 0.0
    %1327 = vmatprep.subr.mxu0 0.0
    %1328 = vmatpush1.msra.mxu0 0.0
    %1329 = vmatprep.subr.mxu0 0.0
    %1330 = vmatpush1.msra.mxu0 0.0
    %1331 = vmatprep.subr.mxu0 0.0
    %1332 = vmatpush1.msra.mxu0 0.0
    %1333 = vmatprep.subr.mxu0 0.0
    %1334 = vmatpush1.msra.mxu0 0.0
    %1335 = vmatprep.subr.mxu0 0.0
    %1336 = vmatpush1.msra.mxu0 0.0
    %1337 = vmatprep.subr.mxu0 0.0
    %1338 = vmatpush1.msra.mxu0 0.0
    %1339 = vmatprep.subr.mxu0 0.0
    %1340 = vmatpush1.msra.mxu0 0.0
    %1341 = vmatprep.subr.mxu0 0.0
    %1342 = vmatpush1.msra.mxu0 0.0
    %1343 = vmatprep.subr.mxu0 0.0
    %1344 = vmatpush1.msra.mxu0 0.0
    %1345 = vmatprep.subr.mxu0 0.0
    %1346 = vmatpush1.msra.mxu0 0.0
    %1347 = vmatprep.subr.mxu0 0.0
    %1348 = vmatpush1.msra.mxu0 0.0
    %1349 = vmatprep.subr.mxu0 0.0
    %1350 = vmatpush1.msra.mxu0 0.0
    %1351 = vmatprep.subr.mxu0 0.0
    %1352 = vmatpush1.msra.mxu0 0.0
    %1353 = vmatprep.subr.mxu0 0.0
    %1354 = vmatpush1.msra.mxu0 0.0
    %1355 = vmatprep.subr.mxu0 0.0
    %1356 = vmatpush1.msra.mxu0 0.0
    %1357 = vmatprep.subr.mxu0 0.0
    %1358 = vmatpush1.msra.mxu0 0.0
    %1359 = vmatprep.subr.mxu0 0.0
    %1360 = vmatpush1.msra.mxu0 0.0
    %1361 = vmatprep.subr.mxu0 0.0
    %1362 = vmatpush1.msra.mxu0 0.0
    %1363 = vmatprep.subr.mxu0 0.0
    %1364 = vmatpush1.msra.mxu0 0.0
    %1365 = vmatprep.subr.mxu0 0.0
    %1366 = vmatpush1.msra.mxu0 0.0
    %1367 = vmatprep.subr.mxu0 0.0
    %1368 = vmatpush1.msra.mxu0 0.0
    %1369 = vmatprep.mubr.f32.mxu0 0.0
    %1370 = vmatmul.mubr.f32.gmra.mrb[0].mxu0 %v1303
    %v1371 = vpop.f32.mrb[0].mxu0
    %v1372 = vadd.f32 0.0, %v1371
    %v1373 = vpop.f32.mrb[0].mxu0
    %1374 = vdwg.mxu0
    %v1375 = vadd.f32 %v1301, %v1372
    %v1376 = vrot.slane %v1225, 2
    %v1377 = vsel %vm501, %v1376, 0
    %1379 = vmatprep.subr.mxu0 0.0
    %1380 = vmatpush1.msra.mxu0 %v662
    %1381 = vmatprep.subr.mxu0 0.0
    %1382 = vmatpush1.msra.mxu0 0.0
    %1383 = vmatprep.subr.mxu0 0.0
    %1384 = vmatpush1.msra.mxu0 0.0
    %1385 = vmatprep.subr.mxu0 0.0
    %1386 = vmatpush1.msra.mxu0 0.0
    %1387 = vmatprep.subr.mxu0 0.0
    %1388 = vmatpush1.msra.mxu0 0.0
    %1389 = vmatprep.subr.mxu0 0.0
    %1390 = vmatpush1.msra.mxu0 0.0
    %1391 = vmatprep.subr.mxu0 0.0
    %1392 = vmatpush1.msra.mxu0 0.0
    %1393 = vmatprep.subr.mxu0 0.0
    %1394 = vmatpush1.msra.mxu0 0.0
    %1395 = vmatprep.subr.mxu0 0.0
    %1396 = vmatpush1.msra.mxu0 0.0
    %1397 = vmatprep.subr.mxu0 0.0
    %1398 = vmatpush1.msra.mxu0 0.0
    %1399 = vmatprep.subr.mxu0 0.0
    %1400 = vmatpush1.msra.mxu0 0.0
    %1401 = vmatprep.subr.mxu0 0.0
    %1402 = vmatpush1.msra.mxu0 0.0
    %1403 = vmatprep.subr.mxu0 0.0
    %1404 = vmatpush1.msra.mxu0 0.0
    %1405 = vmatprep.subr.mxu0 0.0
    %1406 = vmatpush1.msra.mxu0 0.0
    %1407 = vmatprep.subr.mxu0 0.0
    %1408 = vmatpush1.msra.mxu0 0.0
    %1409 = vmatprep.subr.mxu0 0.0
    %1410 = vmatpush1.msra.mxu0 0.0
    %1411 = vmatprep.subr.mxu0 0.0
    %1412 = vmatpush1.msra.mxu0 0.0
    %1413 = vmatprep.subr.mxu0 0.0
    %1414 = vmatpush1.msra.mxu0 0.0
    %1415 = vmatprep.subr.mxu0 0.0
    %1416 = vmatpush1.msra.mxu0 0.0
    %1417 = vmatprep.subr.mxu0 0.0
    %1418 = vmatpush1.msra.mxu0 0.0
    %1419 = vmatprep.subr.mxu0 0.0
    %1420 = vmatpush1.msra.mxu0 0.0
    %1421 = vmatprep.subr.mxu0 0.0
    %1422 = vmatpush1.msra.mxu0 0.0
    %1423 = vmatprep.subr.mxu0 0.0
    %1424 = vmatpush1.msra.mxu0 0.0
    %1425 = vmatprep.subr.mxu0 0.0
    %1426 = vmatpush1.msra.mxu0 0.0
    %1427 = vmatprep.subr.mxu0 0.0
    %1428 = vmatpush1.msra.mxu0 0.0
    %1429 = vmatprep.subr.mxu0 0.0
    %1430 = vmatpush1.msra.mxu0 0.0
    %1431 = vmatprep.subr.mxu0 0.0
    %1432 = vmatpush1.msra.mxu0 0.0
    %1433 = vmatprep.subr.mxu0 0.0
    %1434 = vmatpush1.msra.mxu0 0.0
    %1435 = vmatprep.subr.mxu0 0.0
    %1436 = vmatpush1.msra.mxu0 0.0
    %1437 = vmatprep.subr.mxu0 0.0
    %1438 = vmatpush1.msra.mxu0 0.0
    %1439 = vmatprep.subr.mxu0 0.0
    %1440 = vmatpush1.msra.mxu0 0.0
    %1441 = vmatprep.subr.mxu0 0.0
    %1442 = vmatpush1.msra.mxu0 0.0
    %1443 = vmatprep.mubr.f32.mxu0 0.0
    %1444 = vmatmul.mubr.f32.gmra.mrb[0].mxu0 %v1377
    %v1445 = vpop.f32.mrb[0].mxu0
    %v1446 = vadd.f32 0.0, %v1445
    %v1447 = vpop.f32.mrb[0].mxu0
    %1448 = vdwg.mxu0
    %v1449 = vadd.f32 %v1375, %v1446
    %v1450 = vrot.slane %v1225, 3
    %v1451 = vsel %vm501, %v1450, 0
    %1453 = vmatprep.subr.mxu0 0.0
    %1454 = vmatpush1.msra.mxu0 %v740
    %1455 = vmatprep.subr.mxu0 0.0
    %1456 = vmatpush1.msra.mxu0 0.0
    %1457 = vmatprep.subr.mxu0 0.0
    %1458 = vmatpush1.msra.mxu0 0.0
    %1459 = vmatprep.subr.mxu0 0.0
    %1460 = vmatpush1.msra.mxu0 0.0
    %1461 = vmatprep.subr.mxu0 0.0
    %1462 = vmatpush1.msra.mxu0 0.0
    %1463 = vmatprep.subr.mxu0 0.0
    %1464 = vmatpush1.msra.mxu0 0.0
    %1465 = vmatprep.subr.mxu0 0.0
    %1466 = vmatpush1.msra.mxu0 0.0
    %1467 = vmatprep.subr.mxu0 0.0
    %1468 = vmatpush1.msra.mxu0 0.0
    %1469 = vmatprep.subr.mxu0 0.0
    %1470 = vmatpush1.msra.mxu0 0.0
    %1471 = vmatprep.subr.mxu0 0.0
    %1472 = vmatpush1.msra.mxu0 0.0
    %1473 = vmatprep.subr.mxu0 0.0
    %1474 = vmatpush1.msra.mxu0 0.0
    %1475 = vmatprep.subr.mxu0 0.0
    %1476 = vmatpush1.msra.mxu0 0.0
    %1477 = vmatprep.subr.mxu0 0.0
    %1478 = vmatpush1.msra.mxu0 0.0
    %1479 = vmatprep.subr.mxu0 0.0
    %1480 = vmatpush1.msra.mxu0 0.0
    %1481 = vmatprep.subr.mxu0 0.0
    %1482 = vmatpush1.msra.mxu0 0.0
    %1483 = vmatprep.subr.mxu0 0.0
    %1484 = vmatpush1.msra.mxu0 0.0
    %1485 = vmatprep.subr.mxu0 0.0
    %1486 = vmatpush1.msra.mxu0 0.0
    %1487 = vmatprep.subr.mxu0 0.0
    %1488 = vmatpush1.msra.mxu0 0.0
    %1489 = vmatprep.subr.mxu0 0.0
    %1490 = vmatpush1.msra.mxu0 0.0
    %1491 = vmatprep.subr.mxu0 0.0
    %1492 = vmatpush1.msra.mxu0 0.0
    %1493 = vmatprep.subr.mxu0 0.0
    %1494 = vmatpush1.msra.mxu0 0.0
    %1495 = vmatprep.subr.mxu0 0.0
    %1496 = vmatpush1.msra.mxu0 0.0
    %1497 = vmatprep.subr.mxu0 0.0
    %1498 = vmatpush1.msra.mxu0 0.0
    %1499 = vmatprep.subr.mxu0 0.0
    %1500 = vmatpush1.msra.mxu0 0.0
    %1501 = vmatprep.subr.mxu0 0.0
    %1502 = vmatpush1.msra.mxu0 0.0
    %1503 = vmatprep.subr.mxu0 0.0
    %1504 = vmatpush1.msra.mxu0 0.0
    %1505 = vmatprep.subr.mxu0 0.0
    %1506 = vmatpush1.msra.mxu0 0.0
    %1507 = vmatprep.subr.mxu0 0.0
    %1508 = vmatpush1.msra.mxu0 0.0
    %1509 = vmatprep.subr.mxu0 0.0
    %1510 = vmatpush1.msra.mxu0 0.0
    %1511 = vmatprep.subr.mxu0 0.0
    %1512 = vmatpush1.msra.mxu0 0.0
    %1513 = vmatprep.subr.mxu0 0.0
    %1514 = vmatpush1.msra.mxu0 0.0
    %1515 = vmatprep.subr.mxu0 0.0
    %1516 = vmatpush1.msra.mxu0 0.0
    %1517 = vmatprep.mubr.f32.mxu0 0.0
    %1518 = vmatmul.mubr.f32.gmra.mrb[0].mxu0 %v1451
    %v1519 = vpop.f32.mrb[0].mxu0
    %v1520 = vadd.f32 0.0, %v1519
    %v1521 = vpop.f32.mrb[0].mxu0
    %1522 = vdwg.mxu0
    %v1523 = vadd.f32 %v1449, %v1520
    %v1525 = vlaneseq
    %v1526 = vshrl.u32 %v1525, 7
    %v1527 = vsub.s32 0, %v1526
    %v1528 = vrot.slane %v1523, %v1527
    %v1530 = vsel %vm59, %v812, %v1528
    %1531 = vst [vmem:[#allocation2] sm:$0x3] %v1530
    // Predicated region
    $region34: #{tpu_custom_call.1} parent=1 // pred_check
      _
    $region35: #{tpu_custom_call.1} parent=1 // pred_check_branch
      %1533 = sbr.rel (0) target = $region37
    $region36: #{tpu_custom_call.1} parent=1 // pred_region
      %s1535 = ssub.s32 32, 32
      %1536 = vsyncadd [#allocation3], %s1535
      %s1538 = sshll.u32 [#allocation2], 4
      %s1539 = int_to_ptr.vmem [resolvable:$true] %s1538
      %1541 = dma.vmem_to_hbm [thread:$0]  %s1539, 32, %s8, [#allocation3]
    $region37: #{tpu_custom_call.1} parent=1 // pred_fallthru
      _
    // Predicated region
    $region38: #{tpu_custom_call.1} parent=1 // pred_check
      _
    $region39: #{tpu_custom_call.1} parent=1 // pred_check_branch
      %1543 = sbr.rel (0) target = $region41
    $region40: #{tpu_custom_call.1} parent=1 // pred_region
      %1544 = dma.done [#allocation3], 32
    $region41: #{tpu_custom_call.1} parent=1 // pred_fallthru
      _
    %1545 = vsyncpa [#allocation3], 1

</llo_original>
